<compile_context>
chip_gen: v5e
topology: v5e:2x2
jax: 0.10.0
libtpu: 0.0.40
codegen_flags: <defaults>
</compile_context>

<pallas_src>
import functools

import jax
import jax.numpy as jnp
from jax.experimental import pallas as pl
from jax.experimental.pallas import tpu as pltpu

HIDS = 128


def _lrelu(v):
    # nn.LeakyReLU(0.2)
    return jnp.where(v >= 0, v, 0.2 * v)


def _softplus(v):
    # numerically stable F.softplus
    return jnp.maximum(v, 0.0) + jnp.log1p(jnp.exp(-jnp.abs(v)))


def _round_up(v, m):
    return ((v + m - 1) // m) * m


def _mvae_kernel(num_interv, temp, dim, z_dim, c_dim,
                 # batch-tiled inputs
                 xcc_ref, eps_ref,
                 # VMEM-resident block-diagonal parameters
                 w1_ref, b1_ref, w2_ref, b2_ref, cshift_ref,
                 d1_ref, d1b_ref, d2_ref, d2b_ref,
                 # packed output [y_hat | x_recon | mu | var]
                 out_ref):
    f32 = jnp.float32
    bf16 = jnp.bfloat16

    xcc = xcc_ref[...]                       # (tn, dim + 2*c_dim) = [x | c | c2]
    eps = eps_ref[...]                       # (tn, z_dim)

    # ---- layer 1: block-diag [fc1 | c1 | c1] -> [h_enc | h_c | h_c2] ----
    h = _lrelu(jnp.dot(xcc.astype(bf16), w1_ref[...],
                       preferred_element_type=f32) + b1_ref[...])

    # ---- layer 2: block-diag [fc_mean|fc_var | c2 | c2] ----
    #      -> [mu | var_raw | logits_c | logits_c2]
    p = jnp.dot(h.astype(bf16), w2_ref[...],
                preferred_element_type=f32) + b2_ref[...]
    mu = p[:, 0:z_dim]
    var = _softplus(p[:, z_dim:2 * z_dim])

    # ---- reparametrize: z = eps * sqrt(var) + mu ----
    z = eps * jnp.sqrt(var) + mu

    # ---- latent(): z + bc*csz (+ bc2*csz2) ----
    if num_interv == 0:
        u = z
    else:
        cs = cshift_ref[...]                 # (1, c_dim)

        def _softmax(logits):
            logits = logits * temp           # reference: softmax(c2(h) * temp)
            m = jnp.max(logits, axis=1, keepdims=True)
            e = jnp.exp(logits - m)
            return e / jnp.sum(e, axis=1, keepdims=True)

        bc = _softmax(p[:, 2 * z_dim:3 * z_dim])
        csz = jnp.sum(xcc[:, dim:dim + c_dim] * cs, axis=1, keepdims=True)
        u = z + bc * csz
        if num_interv == 2:
            bc2 = _softmax(p[:, 3 * z_dim:4 * z_dim])
            csz2 = jnp.sum(xcc[:, dim + c_dim:dim + 2 * c_dim] * cs,
                           axis=1, keepdims=True)
            u = u + bc2 * csz2

    # ---- decode: block-diag d1/d2 over lane-stacked [u | z] ----
    uz = jnp.concatenate([u, z], axis=1)     # (tn, 2*z_dim)
    hd = _lrelu(jnp.dot(uz.astype(bf16), d1_ref[...],
                        preferred_element_type=f32) + d1b_ref[...])
    dec = _lrelu(jnp.dot(hd.astype(bf16), d2_ref[...],
                         preferred_element_type=f32) + d2b_ref[...])
    # dec lanes: [y_hat (dim) | x_recon (dim)]

    # ---- packed output via direct sub-slice stores (no concat / zero-fill) ----
    out_ref[:, 0:2 * dim] = dec
    out_ref[:, 2 * dim:2 * dim + z_dim] = mu
    out_ref[:, 2 * dim + z_dim:2 * dim + 2 * z_dim] = var


def init_params(key, dim, z_dim, c_dim):
    ks = jax.random.split(key, 7)

    def lin(k, fin, fout, std=0.02):
        w = jax.random.normal(k, (fin, fout), jnp.float32) * std
        b = jnp.zeros((1, fout), jnp.float32)
        return w, b

    p = {}
    p["fc1_w"], p["fc1_b"] = lin(ks[0], dim, HIDS)
    p["fcm_w"], p["fcm_b"] = lin(ks[1], HIDS, z_dim)
    p["fcv_w"], p["fcv_b"] = lin(ks[2], HIDS, z_dim)
    p["c1_w"], p["c1_b"] = lin(ks[3], c_dim, HIDS)
    p["c2_w"], p["c2_b"] = lin(ks[4], HIDS, z_dim)
    p["d1_w"], p["d1_b"] = lin(ks[5], z_dim, HIDS)
    p["d2_w"], p["d2_b"] = lin(ks[6], HIDS, dim)
    p["c_shift"] = jnp.ones((1, c_dim), jnp.float32)   # torch.ones(c_dim)
    return p


def mvae_forward(params, x, c, c2, eps, num_interv=1, temp=1.0, tile_n=2048):
    assert num_interv in (0, 1, 2)
    n, dim = x.shape
    z_dim = eps.shape[1]
    c_dim = c.shape[1]
    f32 = jnp.float32
    bf16 = jnp.bfloat16

    # ---- batch tiling: big tiles (overhead-dominated otherwise), but keep
    #      >= 2 grid steps when the batch allows it (v7x megacore) ----
    tile_n = max(8, min(_round_up(tile_n, 8), _round_up(pl.cdiv(n, 2), 8)))
    num_tiles = pl.cdiv(n, tile_n)
    n_pad = num_tiles * tile_n

    # lane-stacked per-row input to the fused first layer: [x | c | c2]
    xcc = jnp.concatenate([x, c, c2], axis=1)
    if n_pad != n:
        rp = ((0, n_pad - n), (0, 0))
        xcc = jnp.pad(xcc, rp)
        eps = jnp.pad(eps, rp)

    f_in = dim + 2 * c_dim

    # ---- block-diagonal weights (built once in the wrapper, never in-kernel) ----
    w1 = jnp.zeros((f_in, 3 * HIDS), f32)
    w1 = w1.at[0:dim, 0:HIDS].set(params["fc1_w"])
    w1 = w1.at[dim:dim + c_dim, HIDS:2 * HIDS].set(params["c1_w"])
    w1 = w1.at[dim + c_dim:, 2 * HIDS:].set(params["c1_w"])
    b1 = jnp.concatenate([params["fc1_b"], params["c1_b"], params["c1_b"]],
                         axis=1)

    w2 = jnp.zeros((3 * HIDS, 4 * z_dim), f32)
    w2 = w2.at[0:HIDS, 0:z_dim].set(params["fcm_w"])
    w2 = w2.at[0:HIDS, z_dim:2 * z_dim].set(params["fcv_w"])
    w2 = w2.at[HIDS:2 * HIDS, 2 * z_dim:3 * z_dim].set(params["c2_w"])
    w2 = w2.at[2 * HIDS:, 3 * z_dim:].set(params["c2_w"])
    b2 = jnp.concatenate([params["fcm_b"], params["fcv_b"],
                          params["c2_b"], params["c2_b"]], axis=1)

    d1 = jnp.zeros((2 * z_dim, 2 * HIDS), f32)
    d1 = d1.at[0:z_dim, 0:HIDS].set(params["d1_w"])
    d1 = d1.at[z_dim:, HIDS:].set(params["d1_w"])
    d1b = jnp.concatenate([params["d1_b"], params["d1_b"]], axis=1)

    d2 = jnp.zeros((2 * HIDS, 2 * dim), f32)
    d2 = d2.at[0:HIDS, 0:dim].set(params["d2_w"])
    d2 = d2.at[HIDS:, dim:].set(params["d2_w"])
    d2b = jnp.concatenate([params["d2_b"], params["d2_b"]], axis=1)

    w_inputs = [
        w1.astype(bf16), b1,
        w2.astype(bf16), b2,
        params["c_shift"],
        d1.astype(bf16), d1b,
        d2.astype(bf16), d2b,
    ]

    out_w = 2 * dim + 2 * z_dim   # [y_hat | x_recon | mu | var], no pad lanes

    def row_spec(feat):
        return pl.BlockSpec((tile_n, feat), lambda i: (i, 0))

    # weights/biases: constant index_map -> VMEM-resident across grid steps
    in_specs = ([row_spec(f_in), row_spec(z_dim)]
                + [pl.BlockSpec(w.shape, lambda i: (0, 0)) for w in w_inputs])

    # rough cost hint for the XLA scheduler (block-diagonal matmul dims)
    flops_row = 2 * (f_in * 3 * HIDS + 3 * HIDS * 4 * z_dim
                     + 2 * z_dim * 2 * HIDS + 2 * HIDS * 2 * dim)
    transc_row = 5 * z_dim   # softmax exps (2 paths), softplus exp/log, sqrt
    bytes_row = 4 * (f_in + z_dim + out_w)
    w_bytes = sum(int(w.size) * w.dtype.itemsize for w in w_inputs)
    cost = pl.CostEstimate(flops=flops_row * n_pad,
                           transcendentals=transc_row * n_pad,
                           bytes_accessed=bytes_row * n_pad + w_bytes)

    kernel = functools.partial(_mvae_kernel, num_interv, float(temp),
                               dim, z_dim, c_dim)
    packed = pl.pallas_call(
        kernel,
        grid=(num_tiles,),
        in_specs=in_specs,
        out_specs=pl.BlockSpec((tile_n, out_w), lambda i: (i, 0)),
        out_shape=jax.ShapeDtypeStruct((n_pad, out_w), f32),
        compiler_params=pltpu.CompilerParams(
            dimension_semantics=("parallel",),
            vmem_limit_bytes=48 * 1024 * 1024),
        cost_estimate=cost,
    )(xcc, eps, *w_inputs)

    y_hat = packed[:n, 0:dim]
    x_recon = packed[:n, dim:2 * dim]
    mu = packed[:n, 2 * dim:2 * dim + z_dim]
    var = packed[:n, 2 * dim + z_dim:2 * dim + 2 * z_dim]
    return y_hat, x_recon, mu, var


def _mvae_reference(params, x, c, c2, eps, num_interv=1, temp=1.0):
    """Pure-JAX f32 reference mirroring the PyTorch forward."""
    def lrelu(v):
        return jnp.where(v >= 0, v, 0.2 * v)

    def softplus(v):
        return jnp.maximum(v, 0.0) + jnp.log1p(jnp.exp(-jnp.abs(v)))

    def c_encode(cv):
        h = lrelu(cv @ params["c1_w"] + params["c1_b"])
        logits = (h @ params["c2_w"] + params["c2_b"]) * temp
        bc = jax.nn.softmax(logits, axis=1)
        s = jnp.sum(cv * params["c_shift"], axis=1)
        return bc, s

    h = lrelu(x @ params["fc1_w"] + params["fc1_b"])
    mu = h @ params["fcm_w"] + params["fcm_b"]
    var = softplus(h @ params["fcv_w"] + params["fcv_b"])
    z = eps * jnp.sqrt(var) + mu

    bc, csz = c_encode(c)
    bc2, csz2 = c_encode(c2)
    if num_interv == 0:
        u = z
    elif num_interv == 1:
        u = z + bc * csz[:, None]
    else:
        u = z + bc * csz[:, None] + bc2 * csz2[:, None]

    def decode(v):
        hd = lrelu(v @ params["d1_w"] + params["d1_b"])
        return lrelu(hd @ params["d2_w"] + params["d2_b"])

    return decode(u), decode(z), mu, var


if __name__ == "__main__":
    # small, forward-consistent shapes; tile_n clamps to 64 -> 2 grid steps
    N, DIM, Z_DIM, C_DIM = 128, 16, 8, 8

    key = jax.random.PRNGKey(0)
    k_par, k_x, k_c, k_c2, k_eps = jax.random.split(key, 5)

    params = init_params(k_par, DIM, Z_DIM, C_DIM)
    x = jax.random.normal(k_x, (N, DIM), jnp.float32)
    c = jax.random.normal(k_c, (N, C_DIM), jnp.float32)
    c2 = jax.random.normal(k_c2, (N, C_DIM), jnp.float32)
    # deterministic reparametrization noise (stands in for torch's .normal_())
    eps = jax.random.normal(k_eps, (N, Z_DIM), jnp.float32)

    y_hat, x_recon, mu, var = mvae_forward(params, x, c, c2, eps,
                                           num_interv=1, temp=1.0, tile_n=64)
    jax.block_until_ready((y_hat, x_recon, mu, var))

    assert y_hat.shape == (N, DIM) and x_recon.shape == (N, DIM)
    assert mu.shape == (N, Z_DIM) and var.shape == (N, Z_DIM)
    assert bool(jnp.all(var >= 0.0))

    # correctness check vs. pure-JAX f32 reference (bf16-matmul tolerance)
    ry, rx, rm, rv = _mvae_reference(params, x, c, c2, eps, 1, 1.0)
    for got, ref in ((y_hat, ry), (x_recon, rx), (mu, rm), (var, rv)):
        assert bool(jnp.allclose(got, ref, atol=3e-2, rtol=3e-2)), \
            float(jnp.max(jnp.abs(got - ref)))

    print("KERNEL_OK")
</pallas_src>

<mosaic_0001>
module attributes {stable_mosaic.version = 11 : i64} {
  func.func @_mvae_kernel(%arg0: i32, %arg1: memref<64x32xf32, #tpu.memory_space<vmem>>, %arg2: memref<64x8xf32, #tpu.memory_space<vmem>>, %arg3: memref<32x384xbf16, #tpu.memory_space<vmem>>, %arg4: memref<1x384xf32, #tpu.memory_space<vmem>>, %arg5: memref<384x32xbf16, #tpu.memory_space<vmem>>, %arg6: memref<1x32xf32, #tpu.memory_space<vmem>>, %arg7: memref<1x8xf32, #tpu.memory_space<vmem>>, %arg8: memref<16x256xbf16, #tpu.memory_space<vmem>>, %arg9: memref<1x256xf32, #tpu.memory_space<vmem>>, %arg10: memref<256x32xbf16, #tpu.memory_space<vmem>>, %arg11: memref<1x32xf32, #tpu.memory_space<vmem>>, %arg12: memref<64x48xf32, #tpu.memory_space<vmem>>) attributes {dimension_semantics = [#tpu.dimension_semantics<parallel>], iteration_bounds = array<i64: 2>, scalar_prefetch = 0 : i64, scratch_operands = 0 : i64, tpu.core_type = #tpu.core_type<tc>, window_params = [{transform_indices = @transform_0, window_bounds = array<i64: 64, 32>}, {transform_indices = @transform_1, window_bounds = array<i64: 64, 8>}, {pipeline_mode = #tpu.pipeline_mode<synchronous>, transform_indices = @transform_2, window_bounds = array<i64: 32, 384>}, {pipeline_mode = #tpu.pipeline_mode<synchronous>, transform_indices = @transform_3, window_bounds = array<i64: 1, 384>}, {pipeline_mode = #tpu.pipeline_mode<synchronous>, transform_indices = @transform_4, window_bounds = array<i64: 384, 32>}, {pipeline_mode = #tpu.pipeline_mode<synchronous>, transform_indices = @transform_5, window_bounds = array<i64: 1, 32>}, {pipeline_mode = #tpu.pipeline_mode<synchronous>, transform_indices = @transform_6, window_bounds = array<i64: 1, 8>}, {pipeline_mode = #tpu.pipeline_mode<synchronous>, transform_indices = @transform_7, window_bounds = array<i64: 16, 256>}, {pipeline_mode = #tpu.pipeline_mode<synchronous>, transform_indices = @transform_8, window_bounds = array<i64: 1, 256>}, {pipeline_mode = #tpu.pipeline_mode<synchronous>, transform_indices = @transform_9, window_bounds = array<i64: 256, 32>}, {pipeline_mode = #tpu.pipeline_mode<synchronous>, transform_indices = @transform_10, window_bounds = array<i64: 1, 32>}, {transform_indices = @transform_11, window_bounds = array<i64: 64, 48>}]} {
    %c0 = arith.constant 0 : index
    %c0_0 = arith.constant 0 : index
    %0 = vector.load %arg1[%c0, %c0_0] : memref<64x32xf32, #tpu.memory_space<vmem>>, vector<64x32xf32>
    %c0_1 = arith.constant 0 : index
    %c0_2 = arith.constant 0 : index
    %1 = vector.load %arg2[%c0_1, %c0_2] : memref<64x8xf32, #tpu.memory_space<vmem>>, vector<64x8xf32>
    %2 = arith.truncf %0 : vector<64x32xf32> to vector<64x32xbf16>
    %c0_3 = arith.constant 0 : index
    %c0_4 = arith.constant 0 : index
    %3 = vector.load %arg3[%c0_3, %c0_4] : memref<32x384xbf16, #tpu.memory_space<vmem>>, vector<32x384xbf16>
    %cst = arith.constant dense<0.000000e+00> : vector<64x384xf32>
    %4 = tpu.matmul %2, %3, %cst {dimension_numbers = #tpu.dot_dimension_numbers<[1], [0], [0], [1], [0, 0, 1, 1], [], []>} : vector<64x32xbf16>, vector<32x384xbf16>, vector<64x384xf32> -> vector<64x384xf32>
    %c0_5 = arith.constant 0 : index
    %c0_6 = arith.constant 0 : index
    %5 = vector.load %arg4[%c0_5, %c0_6] : memref<1x384xf32, #tpu.memory_space<vmem>>, vector<1x384xf32>
    %6 = vector.broadcast %5 : vector<1x384xf32> to vector<64x384xf32>
    %7 = arith.addf %4, %6 : vector<64x384xf32>
    %cst_7 = arith.constant 0.000000e+00 : f32
    %8 = vector.broadcast %cst_7 : f32 to vector<64x384xf32>
    %9 = arith.cmpf oge, %7, %8 : vector<64x384xf32>
    %cst_8 = arith.constant 2.000000e-01 : f32
    %10 = vector.broadcast %cst_8 : f32 to vector<64x384xf32>
    %11 = arith.mulf %10, %7 : vector<64x384xf32>
    %12 = arith.select %9, %7, %11 : vector<64x384xi1>, vector<64x384xf32>
    %13 = arith.truncf %12 : vector<64x384xf32> to vector<64x384xbf16>
    %c0_9 = arith.constant 0 : index
    %c0_10 = arith.constant 0 : index
    %14 = vector.load %arg5[%c0_9, %c0_10] : memref<384x32xbf16, #tpu.memory_space<vmem>>, vector<384x32xbf16>
    %cst_11 = arith.constant dense<0.000000e+00> : vector<64x32xf32>
    %15 = tpu.matmul %13, %14, %cst_11 {dimension_numbers = #tpu.dot_dimension_numbers<[1], [0], [0], [1], [0, 0, 1, 1], [], []>} : vector<64x384xbf16>, vector<384x32xbf16>, vector<64x32xf32> -> vector<64x32xf32>
    %c0_12 = arith.constant 0 : index
    %c0_13 = arith.constant 0 : index
    %16 = vector.load %arg6[%c0_12, %c0_13] : memref<1x32xf32, #tpu.memory_space<vmem>>, vector<1x32xf32>
    %17 = vector.broadcast %16 : vector<1x32xf32> to vector<64x32xf32>
    %18 = arith.addf %15, %17 : vector<64x32xf32>
    %19 = vector.extract_strided_slice %18 {offsets = [0, 0], sizes = [64, 8], strides = [1, 1]} : vector<64x32xf32> to vector<64x8xf32>
    %20 = vector.extract_strided_slice %18 {offsets = [0, 8], sizes = [64, 8], strides = [1, 1]} : vector<64x32xf32> to vector<64x8xf32>
    %cst_14 = arith.constant 0.000000e+00 : f32
    %21 = vector.broadcast %cst_14 : f32 to vector<64x8xf32>
    %22 = arith.maximumf %20, %21 : vector<64x8xf32>
    %23 = math.absf %20 : vector<64x8xf32>
    %cst_15 = arith.constant 0.000000e+00 : f32
    %24 = vector.broadcast %cst_15 : f32 to vector<64x8xf32>
    %25 = arith.subf %24, %23 : vector<64x8xf32>
    %26 = math.exp %25 : vector<64x8xf32>
    %27 = math.log1p %26 : vector<64x8xf32>
    %28 = arith.addf %22, %27 : vector<64x8xf32>
    %29 = math.sqrt %28 : vector<64x8xf32>
    %30 = arith.mulf %1, %29 : vector<64x8xf32>
    %31 = arith.addf %30, %19 : vector<64x8xf32>
    %c0_16 = arith.constant 0 : index
    %c0_17 = arith.constant 0 : index
    %32 = vector.load %arg7[%c0_16, %c0_17] : memref<1x8xf32, #tpu.memory_space<vmem>>, vector<1x8xf32>
    %33 = vector.extract_strided_slice %18 {offsets = [0, 16], sizes = [64, 8], strides = [1, 1]} : vector<64x32xf32> to vector<64x8xf32>
    %cst_18 = arith.constant 1.000000e+00 : f32
    %34 = vector.broadcast %cst_18 : f32 to vector<64x8xf32>
    %35 = arith.mulf %33, %34 : vector<64x8xf32>
    %cst_19 = arith.constant dense<0xFF800000> : vector<64xf32>
    %36 = vector.multi_reduction <maximumf>, %35, %cst_19 [1] : vector<64x8xf32> to vector<64xf32>
    %37 = vector.shape_cast %36 : vector<64xf32> to vector<64x1xf32>
    %38 = vector.broadcast %37 : vector<64x1xf32> to vector<64x8xf32>
    %39 = arith.subf %35, %38 : vector<64x8xf32>
    %40 = math.exp %39 : vector<64x8xf32>
    %cst_20 = arith.constant dense<0.000000e+00> : vector<64xf32>
    %41 = vector.multi_reduction <add>, %40, %cst_20 [1] : vector<64x8xf32> to vector<64xf32>
    %42 = vector.shape_cast %41 : vector<64xf32> to vector<64x1xf32>
    %43 = vector.broadcast %42 : vector<64x1xf32> to vector<64x8xf32>
    %44 = arith.divf %40, %43 : vector<64x8xf32>
    %45 = vector.extract_strided_slice %0 {offsets = [0, 16], sizes = [64, 8], strides = [1, 1]} : vector<64x32xf32> to vector<64x8xf32>
    %46 = vector.broadcast %32 : vector<1x8xf32> to vector<64x8xf32>
    %47 = arith.mulf %45, %46 : vector<64x8xf32>
    %cst_21 = arith.constant dense<0.000000e+00> : vector<64xf32>
    %48 = vector.multi_reduction <add>, %47, %cst_21 [1] : vector<64x8xf32> to vector<64xf32>
    %49 = vector.shape_cast %48 : vector<64xf32> to vector<64x1xf32>
    %50 = vector.broadcast %49 : vector<64x1xf32> to vector<64x8xf32>
    %51 = arith.mulf %44, %50 : vector<64x8xf32>
    %52 = arith.addf %31, %51 : vector<64x8xf32>
    %53 = tpu.concatenate %52, %31 in 1 : vector<64x8xf32>, vector<64x8xf32> -> vector<64x16xf32>
    %54 = arith.truncf %53 : vector<64x16xf32> to vector<64x16xbf16>
    %c0_22 = arith.constant 0 : index
    %c0_23 = arith.constant 0 : index
    %55 = vector.load %arg8[%c0_22, %c0_23] : memref<16x256xbf16, #tpu.memory_space<vmem>>, vector<16x256xbf16>
    %cst_24 = arith.constant dense<0.000000e+00> : vector<64x256xf32>
    %56 = tpu.matmul %54, %55, %cst_24 {dimension_numbers = #tpu.dot_dimension_numbers<[1], [0], [0], [1], [0, 0, 1, 1], [], []>} : vector<64x16xbf16>, vector<16x256xbf16>, vector<64x256xf32> -> vector<64x256xf32>
    %c0_25 = arith.constant 0 : index
    %c0_26 = arith.constant 0 : index
    %57 = vector.load %arg9[%c0_25, %c0_26] : memref<1x256xf32, #tpu.memory_space<vmem>>, vector<1x256xf32>
    %58 = vector.broadcast %57 : vector<1x256xf32> to vector<64x256xf32>
    %59 = arith.addf %56, %58 : vector<64x256xf32>
    %cst_27 = arith.constant 0.000000e+00 : f32
    %60 = vector.broadcast %cst_27 : f32 to vector<64x256xf32>
    %61 = arith.cmpf oge, %59, %60 : vector<64x256xf32>
    %cst_28 = arith.constant 2.000000e-01 : f32
    %62 = vector.broadcast %cst_28 : f32 to vector<64x256xf32>
    %63 = arith.mulf %62, %59 : vector<64x256xf32>
    %64 = arith.select %61, %59, %63 : vector<64x256xi1>, vector<64x256xf32>
    %65 = arith.truncf %64 : vector<64x256xf32> to vector<64x256xbf16>
    %c0_29 = arith.constant 0 : index
    %c0_30 = arith.constant 0 : index
    %66 = vector.load %arg10[%c0_29, %c0_30] : memref<256x32xbf16, #tpu.memory_space<vmem>>, vector<256x32xbf16>
    %cst_31 = arith.constant dense<0.000000e+00> : vector<64x32xf32>
    %67 = tpu.matmul %65, %66, %cst_31 {dimension_numbers = #tpu.dot_dimension_numbers<[1], [0], [0], [1], [0, 0, 1, 1], [], []>} : vector<64x256xbf16>, vector<256x32xbf16>, vector<64x32xf32> -> vector<64x32xf32>
    %c0_32 = arith.constant 0 : index
    %c0_33 = arith.constant 0 : index
    %68 = vector.load %arg11[%c0_32, %c0_33] : memref<1x32xf32, #tpu.memory_space<vmem>>, vector<1x32xf32>
    %69 = vector.broadcast %68 : vector<1x32xf32> to vector<64x32xf32>
    %70 = arith.addf %67, %69 : vector<64x32xf32>
    %cst_34 = arith.constant 0.000000e+00 : f32
    %71 = vector.broadcast %cst_34 : f32 to vector<64x32xf32>
    %72 = arith.cmpf oge, %70, %71 : vector<64x32xf32>
    %cst_35 = arith.constant 2.000000e-01 : f32
    %73 = vector.broadcast %cst_35 : f32 to vector<64x32xf32>
    %74 = arith.mulf %73, %70 : vector<64x32xf32>
    %75 = arith.select %72, %70, %74 : vector<64x32xi1>, vector<64x32xf32>
    %c0_36 = arith.constant 0 : index
    %c0_37 = arith.constant 0 : index
    %76 = vector.load %arg12[%c0_36, %c0_37] : memref<64x48xf32, #tpu.memory_space<vmem>>, vector<64x32xf32>
    tpu.vector_store %arg12[%c0_36, %c0_37], %75 {strides = array<i32>} : memref<64x48xf32, #tpu.memory_space<vmem>>, vector<64x32xf32>,
    %c0_38 = arith.constant 0 : index
    %c32 = arith.constant 32 : index
    %77 = vector.load %arg12[%c0_38, %c32] : memref<64x48xf32, #tpu.memory_space<vmem>>, vector<64x8xf32>
    tpu.vector_store %arg12[%c0_38, %c32], %19 {strides = array<i32>} : memref<64x48xf32, #tpu.memory_space<vmem>>, vector<64x8xf32>,
    %c0_39 = arith.constant 0 : index
    %c40 = arith.constant 40 : index
    %78 = vector.load %arg12[%c0_39, %c40] : memref<64x48xf32, #tpu.memory_space<vmem>>, vector<64x8xf32>
    tpu.vector_store %arg12[%c0_39, %c40], %28 {strides = array<i32>} : memref<64x48xf32, #tpu.memory_space<vmem>>, vector<64x8xf32>,
    return
  }
  func.func @transform_0(%arg0: i32) -> (i32, i32) {
    %c0_i32 = arith.constant 0 : i32
    %c0_i32_0 = arith.constant 0 : i32
    return %arg0, %c0_i32 : i32, i32
  }
  func.func @transform_1(%arg0: i32) -> (i32, i32) {
    %c0_i32 = arith.constant 0 : i32
    %c0_i32_0 = arith.constant 0 : i32
    return %arg0, %c0_i32 : i32, i32
  }
  func.func @transform_2(%arg0: i32) -> (i32, i32) {
    %c0_i32 = arith.constant 0 : i32
    %c0_i32_0 = arith.constant 0 : i32
    %c0_i32_1 = arith.constant 0 : i32
    return %c0_i32, %c0_i32_0 : i32, i32
  }
  func.func @transform_3(%arg0: i32) -> (i32, i32) {
    %c0_i32 = arith.constant 0 : i32
    %c0_i32_0 = arith.constant 0 : i32
    %c0_i32_1 = arith.constant 0 : i32
    return %c0_i32, %c0_i32_0 : i32, i32
  }
  func.func @transform_4(%arg0: i32) -> (i32, i32) {
    %c0_i32 = arith.constant 0 : i32
    %c0_i32_0 = arith.constant 0 : i32
    %c0_i32_1 = arith.constant 0 : i32
    return %c0_i32, %c0_i32_0 : i32, i32
  }
  func.func @transform_5(%arg0: i32) -> (i32, i32) {
    %c0_i32 = arith.constant 0 : i32
    %c0_i32_0 = arith.constant 0 : i32
    %c0_i32_1 = arith.constant 0 : i32
    return %c0_i32, %c0_i32_0 : i32, i32
  }
  func.func @transform_6(%arg0: i32) -> (i32, i32) {
    %c0_i32 = arith.constant 0 : i32
    %c0_i32_0 = arith.constant 0 : i32
    %c0_i32_1 = arith.constant 0 : i32
    return %c0_i32, %c0_i32_0 : i32, i32
  }
  func.func @transform_7(%arg0: i32) -> (i32, i32) {
    %c0_i32 = arith.constant 0 : i32
    %c0_i32_0 = arith.constant 0 : i32
    %c0_i32_1 = arith.constant 0 : i32
    return %c0_i32, %c0_i32_0 : i32, i32
  }
  func.func @transform_8(%arg0: i32) -> (i32, i32) {
    %c0_i32 = arith.constant 0 : i32
    %c0_i32_0 = arith.constant 0 : i32
    %c0_i32_1 = arith.constant 0 : i32
    return %c0_i32, %c0_i32_0 : i32, i32
  }
  func.func @transform_9(%arg0: i32) -> (i32, i32) {
    %c0_i32 = arith.constant 0 : i32
    %c0_i32_0 = arith.constant 0 : i32
    %c0_i32_1 = arith.constant 0 : i32
    return %c0_i32, %c0_i32_0 : i32, i32
  }
  func.func @transform_10(%arg0: i32) -> (i32, i32) {
    %c0_i32 = arith.constant 0 : i32
    %c0_i32_0 = arith.constant 0 : i32
    %c0_i32_1 = arith.constant 0 : i32
    return %c0_i32, %c0_i32_0 : i32, i32
  }
  func.func @transform_11(%arg0: i32) -> (i32, i32) {
    %c0_i32 = arith.constant 0 : i32
    %c0_i32_0 = arith.constant 0 : i32
    return %arg0, %c0_i32 : i32, i32
  }
}

</mosaic_0001>

<llo_original>
// kernel: tpu_custom_call.1
$region0: #{tpu_custom_call.1}
  #allocation0 [shape = 'u32[]', space=smem, size = 0x4, offset = 0x4, fixed_abs, tag = 'smem constant byte address 0x4 - core index']
  #allocation1 [shape = 'u32[72,128]{1,0:T(1,128)}', space=vmem, size = 0x9000, scoped, tag = 'internal scratch']
  %s0 = inlined_call_operand.vmem [shape: f32[128,32], index: 0, kind: input, shape index: {}]
  %s1 = inlined_call_operand.vmem [shape: f32[128,8], index: 1, kind: input, shape index: {}]
  %s2 = inlined_call_operand.vmem [shape: bf16[32,384], index: 2, kind: input, shape index: {}]
  %s3 = inlined_call_operand.vmem [shape: f32[1,384], index: 3, kind: input, shape index: {}]
  %s4 = inlined_call_operand.vmem [shape: bf16[384,32], index: 4, kind: input, shape index: {}]
  %s5 = inlined_call_operand.vmem [shape: f32[1,32], index: 5, kind: input, shape index: {}]
  %s6 = inlined_call_operand.vmem [shape: f32[1,8], index: 6, kind: input, shape index: {}]
  %s7 = inlined_call_operand.vmem [shape: bf16[16,256], index: 7, kind: input, shape index: {}]
  %s8 = inlined_call_operand.vmem [shape: f32[1,256], index: 8, kind: input, shape index: {}]
  %s9 = inlined_call_operand.vmem [shape: bf16[256,32], index: 9, kind: input, shape index: {}]
  %s10 = inlined_call_operand.vmem [shape: f32[1,32], index: 10, kind: input, shape index: {}]
  %s11 = inlined_call_operand.vmem [shape: f32[128,48], index: 11, kind: output, shape index: {}]
  %s12 = sld [smem:[#allocation0]]
  $region77: #{tpu_custom_call.1} parent=0
    _
  %s14 = ssub.s32 1, %s12
  %s15 = scalar_select 0, %s14, %s12
  loop: start=0, step=1, limit=4
  $region2: #{tpu_custom_call.1} parent=0 // loop_pre_header
    _
  $region3: #{tpu_custom_call.1} parent=0 // loop_header
    %s17 = sphi 0, %s21
    %p18 = scmp.ge.s32.totalorder %s17, 4
    %s27 = sphi 0, %s29
    %s30 = sphi 0, %s27
    %s31 = sphi 0, %s30
    %s47 = sphi 0, %s31
    %s53 = sphi 0, %s55
    %s56 = sphi 0, %s53
    %s57 = sphi 0, %s56
    %s73 = sphi 0, %s57
    %s77 = sphi 0, %s77
    %s79 = sphi 0, %s77
    %s80 = sphi 0, %s79
    %s94 = sphi 0, %s80
    %s98 = sphi 0, %s98
    %s100 = sphi 0, %s98
    %s101 = sphi 0, %s100
    %s115 = sphi 0, %s101
    %s119 = sphi 0, %s119
    %s121 = sphi 0, %s119
    %s122 = sphi 0, %s121
    %s136 = sphi 0, %s122
    %s140 = sphi 0, %s140
    %s142 = sphi 0, %s140
    %s143 = sphi 0, %s142
    %s157 = sphi 0, %s143
    %s161 = sphi 0, %s161
    %s163 = sphi 0, %s161
    %s164 = sphi 0, %s163
    %s178 = sphi 0, %s164
    %s182 = sphi 0, %s182
    %s184 = sphi 0, %s182
    %s185 = sphi 0, %s184
    %s199 = sphi 0, %s185
    %s203 = sphi 0, %s203
    %s205 = sphi 0, %s203
    %s206 = sphi 0, %s205
    %s220 = sphi 0, %s206
    %s224 = sphi 0, %s224
    %s226 = sphi 0, %s224
    %s227 = sphi 0, %s226
    %s241 = sphi 0, %s227
    %s245 = sphi 0, %s245
    %s247 = sphi 0, %s245
    %s248 = sphi 0, %s247
    %s262 = sphi 0, %s248
    %s268 = sphi 0, %s270
    %s271 = sphi 0, %s268
    %s272 = sphi 0, %s271
    %s288 = sphi 0, %s272
  $region4: #{tpu_custom_call.1} parent=0 // loop_header_branch
    %20 = sbr.rel (%p18) target = $region8
  $region5: #{tpu_custom_call.1} parent=0 // loop_body
    %s22 = ssub.s32 %s17, 1
    %s23 = ssub.s32 %s17, 2
    %s24 = sadd.s32 %s17, 1
    %s25 = ssub.s32 %s17, %s24
    %p26 = scmp.eq.s32.totalorder %s25, 0
    %s28 = sadd.s32 %s27, 1
    %s29 = scalar_select %p26, %s27, %s28
    %p32 = pneg %p26
    %p33 = scmp.eq.s32.totalorder %s17, 1
    %p34 = por %p32, %p33
    %p35 = scmp.ne.s32.totalorder %s27, %s30
    %p36 = scmp.eq.s32.totalorder %s17, 0
    %p37 = por %p35, %p36
    %p38 = scmp.ne.s32.totalorder %s27, %s30
    %p39 = scmp.eq.s32.totalorder %s22, 1
    %p40 = por %p38, %p39
    %p41 = scmp.ne.s32.totalorder %s30, %s31
    %p42 = scmp.eq.s32.totalorder %s22, 0
    %p43 = por %p41, %p42
    %p44 = scmp.ne.s32.totalorder %s30, %s31
    %p45 = scmp.eq.s32.totalorder %s23, 1
    %p46 = por %p44, %p45
    %p48 = scmp.ne.s32.totalorder %s31, %s47
    %p49 = scmp.eq.s32.totalorder %s23, 0
    %p50 = por %p48, %p49
    %s51 = ssub.s32 %s17, %s24
    %p52 = scmp.eq.s32.totalorder %s51, 0
    %s54 = sadd.s32 %s53, 1
    %s55 = scalar_select %p52, %s53, %s54
    %p58 = pneg %p52
    %p59 = scmp.eq.s32.totalorder %s17, 1
    %p60 = por %p58, %p59
    %p61 = scmp.ne.s32.totalorder %s53, %s56
    %p62 = scmp.eq.s32.totalorder %s17, 0
    %p63 = por %p61, %p62
    %p64 = scmp.ne.s32.totalorder %s53, %s56
    %p65 = scmp.eq.s32.totalorder %s22, 1
    %p66 = por %p64, %p65
    %p67 = scmp.ne.s32.totalorder %s56, %s57
    %p68 = scmp.eq.s32.totalorder %s22, 0
    %p69 = por %p67, %p68
    %p70 = scmp.ne.s32.totalorder %s56, %s57
    %p71 = scmp.eq.s32.totalorder %s23, 1
    %p72 = por %p70, %p71
    %p74 = scmp.ne.s32.totalorder %s57, %s73
    %p75 = scmp.eq.s32.totalorder %s23, 0
    %p76 = por %p74, %p75
    %s78 = sadd.s32 %s77, 1
    %p81 = scmp.eq.s32.totalorder %s17, 1
    %p82 = scmp.ne.s32.totalorder %s77, %s79
    %p83 = scmp.eq.s32.totalorder %s17, 0
    %p84 = por %p82, %p83
    %p85 = scmp.ne.s32.totalorder %s77, %s79
    %p86 = scmp.eq.s32.totalorder %s22, 1
    %p87 = por %p85, %p86
    %p88 = scmp.ne.s32.totalorder %s79, %s80
    %p89 = scmp.eq.s32.totalorder %s22, 0
    %p90 = por %p88, %p89
    %p91 = scmp.ne.s32.totalorder %s79, %s80
    %p92 = scmp.eq.s32.totalorder %s23, 1
    %p93 = por %p91, %p92
    %p95 = scmp.ne.s32.totalorder %s80, %s94
    %p96 = scmp.eq.s32.totalorder %s23, 0
    %p97 = por %p95, %p96
    %s99 = sadd.s32 %s98, 1
    %p102 = scmp.eq.s32.totalorder %s17, 1
    %p103 = scmp.ne.s32.totalorder %s98, %s100
    %p104 = scmp.eq.s32.totalorder %s17, 0
    %p105 = por %p103, %p104
    %p106 = scmp.ne.s32.totalorder %s98, %s100
    %p107 = scmp.eq.s32.totalorder %s22, 1
    %p108 = por %p106, %p107
    %p109 = scmp.ne.s32.totalorder %s100, %s101
    %p110 = scmp.eq.s32.totalorder %s22, 0
    %p111 = por %p109, %p110
    %p112 = scmp.ne.s32.totalorder %s100, %s101
    %p113 = scmp.eq.s32.totalorder %s23, 1
    %p114 = por %p112, %p113
    %p116 = scmp.ne.s32.totalorder %s101, %s115
    %p117 = scmp.eq.s32.totalorder %s23, 0
    %p118 = por %p116, %p117
    %s120 = sadd.s32 %s119, 1
    %p123 = scmp.eq.s32.totalorder %s17, 1
    %p124 = scmp.ne.s32.totalorder %s119, %s121
    %p125 = scmp.eq.s32.totalorder %s17, 0
    %p126 = por %p124, %p125
    %p127 = scmp.ne.s32.totalorder %s119, %s121
    %p128 = scmp.eq.s32.totalorder %s22, 1
    %p129 = por %p127, %p128
    %p130 = scmp.ne.s32.totalorder %s121, %s122
    %p131 = scmp.eq.s32.totalorder %s22, 0
    %p132 = por %p130, %p131
    %p133 = scmp.ne.s32.totalorder %s121, %s122
    %p134 = scmp.eq.s32.totalorder %s23, 1
    %p135 = por %p133, %p134
    %p137 = scmp.ne.s32.totalorder %s122, %s136
    %p138 = scmp.eq.s32.totalorder %s23, 0
    %p139 = por %p137, %p138
    %s141 = sadd.s32 %s140, 1
    %p144 = scmp.eq.s32.totalorder %s17, 1
    %p145 = scmp.ne.s32.totalorder %s140, %s142
    %p146 = scmp.eq.s32.totalorder %s17, 0
    %p147 = por %p145, %p146
    %p148 = scmp.ne.s32.totalorder %s140, %s142
    %p149 = scmp.eq.s32.totalorder %s22, 1
    %p150 = por %p148, %p149
    %p151 = scmp.ne.s32.totalorder %s142, %s143
    %p152 = scmp.eq.s32.totalorder %s22, 0
    %p153 = por %p151, %p152
    %p154 = scmp.ne.s32.totalorder %s142, %s143
    %p155 = scmp.eq.s32.totalorder %s23, 1
    %p156 = por %p154, %p155
    %p158 = scmp.ne.s32.totalorder %s143, %s157
    %p159 = scmp.eq.s32.totalorder %s23, 0
    %p160 = por %p158, %p159
    %s162 = sadd.s32 %s161, 1
    %p165 = scmp.eq.s32.totalorder %s17, 1
    %p166 = scmp.ne.s32.totalorder %s161, %s163
    %p167 = scmp.eq.s32.totalorder %s17, 0
    %p168 = por %p166, %p167
    %p169 = scmp.ne.s32.totalorder %s161, %s163
    %p170 = scmp.eq.s32.totalorder %s22, 1
    %p171 = por %p169, %p170
    %p172 = scmp.ne.s32.totalorder %s163, %s164
    %p173 = scmp.eq.s32.totalorder %s22, 0
    %p174 = por %p172, %p173
    %p175 = scmp.ne.s32.totalorder %s163, %s164
    %p176 = scmp.eq.s32.totalorder %s23, 1
    %p177 = por %p175, %p176
    %p179 = scmp.ne.s32.totalorder %s164, %s178
    %p180 = scmp.eq.s32.totalorder %s23, 0
    %p181 = por %p179, %p180
    %s183 = sadd.s32 %s182, 1
    %p186 = scmp.eq.s32.totalorder %s17, 1
    %p187 = scmp.ne.s32.totalorder %s182, %s184
    %p188 = scmp.eq.s32.totalorder %s17, 0
    %p189 = por %p187, %p188
    %p190 = scmp.ne.s32.totalorder %s182, %s184
    %p191 = scmp.eq.s32.totalorder %s22, 1
    %p192 = por %p190, %p191
    %p193 = scmp.ne.s32.totalorder %s184, %s185
    %p194 = scmp.eq.s32.totalorder %s22, 0
    %p195 = por %p193, %p194
    %p196 = scmp.ne.s32.totalorder %s184, %s185
    %p197 = scmp.eq.s32.totalorder %s23, 1
    %p198 = por %p196, %p197
    %p200 = scmp.ne.s32.totalorder %s185, %s199
    %p201 = scmp.eq.s32.totalorder %s23, 0
    %p202 = por %p200, %p201
    %s204 = sadd.s32 %s203, 1
    %p207 = scmp.eq.s32.totalorder %s17, 1
    %p208 = scmp.ne.s32.totalorder %s203, %s205
    %p209 = scmp.eq.s32.totalorder %s17, 0
    %p210 = por %p208, %p209
    %p211 = scmp.ne.s32.totalorder %s203, %s205
    %p212 = scmp.eq.s32.totalorder %s22, 1
    %p213 = por %p211, %p212
    %p214 = scmp.ne.s32.totalorder %s205, %s206
    %p215 = scmp.eq.s32.totalorder %s22, 0
    %p216 = por %p214, %p215
    %p217 = scmp.ne.s32.totalorder %s205, %s206
    %p218 = scmp.eq.s32.totalorder %s23, 1
    %p219 = por %p217, %p218
    %p221 = scmp.ne.s32.totalorder %s206, %s220
    %p222 = scmp.eq.s32.totalorder %s23, 0
    %p223 = por %p221, %p222
    %s225 = sadd.s32 %s224, 1
    %p228 = scmp.eq.s32.totalorder %s17, 1
    %p229 = scmp.ne.s32.totalorder %s224, %s226
    %p230 = scmp.eq.s32.totalorder %s17, 0
    %p231 = por %p229, %p230
    %p232 = scmp.ne.s32.totalorder %s224, %s226
    %p233 = scmp.eq.s32.totalorder %s22, 1
    %p234 = por %p232, %p233
    %p235 = scmp.ne.s32.totalorder %s226, %s227
    %p236 = scmp.eq.s32.totalorder %s22, 0
    %p237 = por %p235, %p236
    %p238 = scmp.ne.s32.totalorder %s226, %s227
    %p239 = scmp.eq.s32.totalorder %s23, 1
    %p240 = por %p238, %p239
    %p242 = scmp.ne.s32.totalorder %s227, %s241
    %p243 = scmp.eq.s32.totalorder %s23, 0
    %p244 = por %p242, %p243
    %s246 = sadd.s32 %s245, 1
    %p249 = scmp.eq.s32.totalorder %s17, 1
    %p250 = scmp.ne.s32.totalorder %s245, %s247
    %p251 = scmp.eq.s32.totalorder %s17, 0
    %p252 = por %p250, %p251
    %p253 = scmp.ne.s32.totalorder %s245, %s247
    %p254 = scmp.eq.s32.totalorder %s22, 1
    %p255 = por %p253, %p254
    %p256 = scmp.ne.s32.totalorder %s247, %s248
    %p257 = scmp.eq.s32.totalorder %s22, 0
    %p258 = por %p256, %p257
    %p259 = scmp.ne.s32.totalorder %s247, %s248
    %p260 = scmp.eq.s32.totalorder %s23, 1
    %p261 = por %p259, %p260
    %p263 = scmp.ne.s32.totalorder %s248, %s262
    %p264 = scmp.eq.s32.totalorder %s23, 0
    %p265 = por %p263, %p264
    %s266 = ssub.s32 %s17, %s24
    %p267 = scmp.eq.s32.totalorder %s266, 0
    %s269 = sadd.s32 %s268, 1
    %s270 = scalar_select %p267, %s268, %s269
    %p273 = pneg %p267
    %p274 = scmp.eq.s32.totalorder %s17, 1
    %p275 = por %p273, %p274
    %p276 = scmp.ne.s32.totalorder %s268, %s271
    %p277 = scmp.eq.s32.totalorder %s17, 0
    %p278 = por %p276, %p277
    %p279 = scmp.ne.s32.totalorder %s268, %s271
    %p280 = scmp.eq.s32.totalorder %s22, 1
    %p281 = por %p279, %p280
    %p282 = scmp.ne.s32.totalorder %s271, %s272
    %p283 = scmp.eq.s32.totalorder %s22, 0
    %p284 = por %p282, %p283
    %p285 = scmp.ne.s32.totalorder %s271, %s272
    %p286 = scmp.eq.s32.totalorder %s23, 1
    %p287 = por %p285, %p286
    %p289 = scmp.ne.s32.totalorder %s272, %s288
    %p290 = scmp.eq.s32.totalorder %s23, 0
    %p291 = por %p289, %p290
    %p292 = scmp.le.s32.totalorder 1, %s17
    %p293 = scmp.lt.s32.totalorder %s17, 3
    %p294 = pnand %p292, %p293
    %p295 = pneg %p294
    // Predicated region
    $region9: #{tpu_custom_call.1} parent=5 // pred_check
      _
    $region10: #{tpu_custom_call.1} parent=5 // pred_check_branch
      %297 = sbr.rel (%p294) target = $region12
    $region11: #{tpu_custom_call.1} parent=5 // pred_region
      %s298 = ssub.s32 %s17, 1
      // Predicated region
      $region13: #{tpu_custom_call.1} parent=11 // pred_check
        %p299 = pneg %p90
      $region14: #{tpu_custom_call.1} parent=11 // pred_check_branch
        %301 = sbr.rel (%p299) target = $region16
      $region15: #{tpu_custom_call.1} parent=11 // pred_region
        _
      $region16: #{tpu_custom_call.1} parent=11 // pred_fallthru
        _
      // Predicated region
      $region17: #{tpu_custom_call.1} parent=11 // pred_check
        %p302 = pneg %p111
      $region18: #{tpu_custom_call.1} parent=11 // pred_check_branch
        %304 = sbr.rel (%p302) target = $region20
      $region19: #{tpu_custom_call.1} parent=11 // pred_region
        _
      $region20: #{tpu_custom_call.1} parent=11 // pred_fallthru
        _
      // Predicated region
      $region21: #{tpu_custom_call.1} parent=11 // pred_check
        %p305 = pneg %p132
      $region22: #{tpu_custom_call.1} parent=11 // pred_check_branch
        %307 = sbr.rel (%p305) target = $region24
      $region23: #{tpu_custom_call.1} parent=11 // pred_region
        _
      $region24: #{tpu_custom_call.1} parent=11 // pred_fallthru
        _
      // Predicated region
      $region25: #{tpu_custom_call.1} parent=11 // pred_check
        %p308 = pneg %p153
      $region26: #{tpu_custom_call.1} parent=11 // pred_check_branch
        %310 = sbr.rel (%p308) target = $region28
      $region27: #{tpu_custom_call.1} parent=11 // pred_region
        _
      $region28: #{tpu_custom_call.1} parent=11 // pred_fallthru
        _
      // Predicated region
      $region29: #{tpu_custom_call.1} parent=11 // pred_check
        %p311 = pneg %p174
      $region30: #{tpu_custom_call.1} parent=11 // pred_check_branch
        %313 = sbr.rel (%p311) target = $region32
      $region31: #{tpu_custom_call.1} parent=11 // pred_region
        _
      $region32: #{tpu_custom_call.1} parent=11 // pred_fallthru
        _
      // Predicated region
      $region33: #{tpu_custom_call.1} parent=11 // pred_check
        %p314 = pneg %p195
      $region34: #{tpu_custom_call.1} parent=11 // pred_check_branch
        %316 = sbr.rel (%p314) target = $region36
      $region35: #{tpu_custom_call.1} parent=11 // pred_region
        _
      $region36: #{tpu_custom_call.1} parent=11 // pred_fallthru
        _
      // Predicated region
      $region37: #{tpu_custom_call.1} parent=11 // pred_check
        %p317 = pneg %p216
      $region38: #{tpu_custom_call.1} parent=11 // pred_check_branch
        %319 = sbr.rel (%p317) target = $region40
      $region39: #{tpu_custom_call.1} parent=11 // pred_region
        _
      $region40: #{tpu_custom_call.1} parent=11 // pred_fallthru
        _
      // Predicated region
      $region41: #{tpu_custom_call.1} parent=11 // pred_check
        %p320 = pneg %p237
      $region42: #{tpu_custom_call.1} parent=11 // pred_check_branch
        %322 = sbr.rel (%p320) target = $region44
      $region43: #{tpu_custom_call.1} parent=11 // pred_region
        _
      $region44: #{tpu_custom_call.1} parent=11 // pred_fallthru
        _
      // Predicated region
      $region45: #{tpu_custom_call.1} parent=11 // pred_check
        %p323 = pneg %p258
      $region46: #{tpu_custom_call.1} parent=11 // pred_check_branch
        %325 = sbr.rel (%p323) target = $region48
      $region47: #{tpu_custom_call.1} parent=11 // pred_region
        _
      $region48: #{tpu_custom_call.1} parent=11 // pred_fallthru
        _
    $region12: #{tpu_custom_call.1} parent=5 // pred_fallthru
      _
    %p326 = scmp.lt.s32.totalorder %s17, 2
    // Predicated region
    $region49: #{tpu_custom_call.1} parent=5 // pred_check
      %p327 = pneg %p326
    $region50: #{tpu_custom_call.1} parent=5 // pred_check_branch
      %329 = sbr.rel (%p327) target = $region52
    $region51: #{tpu_custom_call.1} parent=5 // pred_region
      // Predicated region
      $region53: #{tpu_custom_call.1} parent=51 // pred_check
        %p330 = pneg %p37
      $region54: #{tpu_custom_call.1} parent=51 // pred_check_branch
        %332 = sbr.rel (%p330) target = $region56
      $region55: #{tpu_custom_call.1} parent=51 // pred_region
        %s333 = smul.u32 8, %s17
        %p334 = scmp.lt.s32.totalorder %s333, 15
        %s335 = scalar_select %p334, %s333, 15
        %s336 = smul.addr %s335, 8
        %s337 = scalar_lea.vmem %s0, %s336
        %s338 = smul.u32 8, %s17
      $region56: #{tpu_custom_call.1} parent=51 // pred_fallthru
        _
      // Predicated region
      $region57: #{tpu_custom_call.1} parent=51 // pred_check
        %p339 = pneg %p63
      $region58: #{tpu_custom_call.1} parent=51 // pred_check_branch
        %341 = sbr.rel (%p339) target = $region60
      $region59: #{tpu_custom_call.1} parent=51 // pred_region
        %s342 = smul.u32 8, %s17
        %p343 = scmp.lt.s32.totalorder %s342, 15
        %s344 = scalar_select %p343, %s342, 15
        %s345 = smul.addr %s344, 8
        %s346 = scalar_lea.vmem %s1, %s345
        %s347 = smul.u32 8, %s17
      $region60: #{tpu_custom_call.1} parent=51 // pred_fallthru
        _
    $region52: #{tpu_custom_call.1} parent=5 // pred_fallthru
      _
    %p348 = scmp.le.s32.totalorder 1, %s17
    %p349 = scmp.lt.s32.totalorder %s17, 3
    %p350 = pnand %p348, %p349
    %p351 = pneg %p350
    // Predicated region
    $region61: #{tpu_custom_call.1} parent=5 // pred_check
      _
    $region62: #{tpu_custom_call.1} parent=5 // pred_check_branch
      %353 = sbr.rel (%p350) target = $region64
    $region63: #{tpu_custom_call.1} parent=5 // pred_region
      %s354 = ssub.s32 %s17, 1
      %s355 = smul.u32 8, %s22
      %p356 = scmp.lt.s32.totalorder %s355, 15
      %s357 = scalar_select %p356, %s355, 15
      %s358 = smul.addr %s357, 8
      %s359 = scalar_lea.vmem %s0, %s358
      %p360 = pneg %p43
      %p361 = pneg %p40
      %s362 = smul.u32 8, %s22
      %p363 = scmp.lt.s32.totalorder %s362, 15
      %s364 = scalar_select %p363, %s362, 15
      %s365 = smul.addr %s364, 8
      %s366 = scalar_lea.vmem %s1, %s365
      %p367 = pneg %p69
      %p368 = pneg %p66
      %p369 = pneg %p90
      %p370 = pneg %p87
      %p371 = pneg %p111
      %p372 = pneg %p108
      %p373 = pneg %p132
      %p374 = pneg %p129
      %p375 = pneg %p153
      %p376 = pneg %p150
      %p377 = pneg %p174
      %p378 = pneg %p171
      %p379 = pneg %p195
      %p380 = pneg %p192
      %p381 = pneg %p216
      %p382 = pneg %p213
      %p383 = pneg %p237
      %p384 = pneg %p234
      %p385 = pneg %p258
      %p386 = pneg %p255
      %p387 = pneg %p284
      %p388 = pneg %p281
      %s389 = smul.u32 8, %s22
      %p390 = scmp.lt.s32.totalorder %s389, 15
      %s391 = scalar_select %p390, %s389, 15
      %s392 = smul.addr %s391, 8
      %s393 = scalar_lea.vmem %s11, %s392
      %s394 = smul.u32 8, %s22
      %p395 = scmp.lt.s32.totalorder %s394, 15
      %s396 = scalar_select %p395, %s394, 15
      %s397 = smul.addr %s396, 8
      %s398 = scalar_lea.vmem %s0, %s397
      %s399 = smul.u32 8, %s22
      %s400 = smul.u32 8, %s22
      %p401 = scmp.lt.s32.totalorder %s400, 15
      %s402 = scalar_select %p401, %s400, 15
      %s403 = smul.addr %s402, 8
      %s404 = scalar_lea.vmem %s1, %s403
      %s405 = smul.u32 8, %s22
      %s406 = smul.u32 8, %s22
      %p407 = scmp.lt.s32.totalorder %s406, 15
      %s408 = scalar_select %p407, %s406, 15
      %s409 = smul.addr %s408, 8
      %s410 = scalar_lea.vmem %s11, %s409
      %s411 = smul.u32 8, %s22
      %v413 = vld [vmem:[%s398] sm:$0xff]
      %v414 = vld [vmem:[%s398 + $0x8] sm:$0xff]
      %v415 = vld [vmem:[%s398 + $0x10] sm:$0xff]
      %v416 = vld [vmem:[%s398 + $0x18] sm:$0xff]
      %v417 = vld [vmem:[%s398 + $0x20] sm:$0xff]
      %v418 = vld [vmem:[%s398 + $0x28] sm:$0xff]
      %v419 = vld [vmem:[%s398 + $0x30] sm:$0xff]
      %v420 = vld [vmem:[%s398 + $0x38] sm:$0xff]
      %v421 = vld [vmem:[%s404] sm:$0xff]
      %v422 = vld [vmem:[%s404 + $0x8] sm:$0xff]
      %v423 = vld [vmem:[%s404 + $0x10] sm:$0xff]
      %v424 = vld [vmem:[%s404 + $0x18] sm:$0xff]
      %v425 = vld [vmem:[%s404 + $0x20] sm:$0xff]
      %v426 = vld [vmem:[%s404 + $0x28] sm:$0xff]
      %v427 = vld [vmem:[%s404 + $0x30] sm:$0xff]
      %v428 = vld [vmem:[%s404 + $0x38] sm:$0xff]
      %v429 = vpack.c.bf16 %v414, %v413
      %v430 = vpack.c.bf16 %v416, %v415
      %v431 = vpack.c.bf16 %v418, %v417
      %v432 = vpack.c.bf16 %v420, %v419
      %v433 = vld [vmem:[%s2] sm:$0xff]
      %v434 = vld [vmem:[%s2 + $0x8] sm:$0xf]
      %v435 = vld [vmem:[%s2 + $0xc] sm:$0xff]
      %v436 = vld [vmem:[%s2 + $0x14] sm:$0xf]
      %v437 = vld [vmem:[%s2 + $0x18] sm:$0xff]
      %v438 = vld [vmem:[%s2 + $0x20] sm:$0xf]
      %v439 = vld [vmem:[%s2 + $0x24] sm:$0xff]
      %v440 = vld [vmem:[%s2 + $0x2c] sm:$0xf]
      %v441 = vld [vmem:[%s3] sm:$0x7]
      %v443 = vperm.slane %v441, 0
      %v444 = vperm.slane %v441, 1
      %v445 = vperm.slane %v441, 2
      %v457 = vunpack.c.l.b16 %v433
      %v458 = vunpack.c.h.b16 %v433
      %v459 = vunpack.c.l.b16 %v434
      %v460 = vunpack.c.l.b16 %v435
      %v461 = vunpack.c.h.b16 %v435
      %v462 = vunpack.c.l.b16 %v436
      %v463 = vunpack.c.l.b16 %v437
      %v464 = vunpack.c.h.b16 %v437
      %v465 = vunpack.c.l.b16 %v438
      %v466 = vunpack.c.l.b16 %v439
      %v467 = vunpack.c.h.b16 %v439
      %v468 = vunpack.c.l.b16 %v440
      %v469 = vpack.c.b16 %v460, %v457
      %v470 = vpack.c.b16 %v461, %v458
      %v471 = vpack.c.b16 %v462, %v459
      %v472 = vpack.c.b16 %v466, %v463
      %v473 = vpack.c.b16 %v467, %v464
      %v474 = vpack.c.b16 %v468, %v465
      %vm481 = vcmask 261120
      %v483 = vsel %vm481, %v429, 0
      %v486 = vsel %vm481, %v430, 0
      %v489 = vsel %vm481, %v431, 0
      %v492 = vsel %vm481, %v432, 0
      %494 = vmatpush.bf16.msra.mxu0 0
      %495 = vmatpush.bf16.msra.mxu0 0
      %496 = vmatpush.bf16.msra.mxu0 0
      %497 = vmatpush.bf16.msra.mxu0 0
      %498 = vmatpush.bf16.msra.mxu0 0
      %499 = vmatpush.bf16.msra.mxu0 0
      %500 = vmatpush.bf16.msra.mxu0 %v472
      %501 = vmatpush.bf16.msra.mxu0 %v469
      %502 = vmatmul.bf16.gmra.mxu0 %v483
      %v503 = vpop.f32.mrf.mxu0
      %v504 = vadd.f32 %v443, %v503
      %v505 = vpop.f32.mrf.mxu0
      %v506 = vadd.f32 %v443, %v505
      %507 = vmatmul.bf16.gmra.mxu0 %v486
      %v508 = vpop.f32.mrf.mxu0
      %v509 = vadd.f32 %v443, %v508
      %v510 = vpop.f32.mrf.mxu0
      %v511 = vadd.f32 %v443, %v510
      %512 = vmatmul.bf16.gmra.mxu0 %v489
      %v513 = vpop.f32.mrf.mxu0
      %v514 = vadd.f32 %v443, %v513
      %v515 = vpop.f32.mrf.mxu0
      %v516 = vadd.f32 %v443, %v515
      %517 = vmatmul.bf16.gmra.mxu0 %v492
      %v518 = vpop.f32.mrf.mxu0
      %v519 = vadd.f32 %v443, %v518
      %v520 = vpop.f32.mrf.mxu0
      %v521 = vadd.f32 %v443, %v520
      %522 = vdwg.mxu0
      %523 = vmatpush.bf16.msra.mxu0 0
      %524 = vmatpush.bf16.msra.mxu0 0
      %525 = vmatpush.bf16.msra.mxu0 0
      %526 = vmatpush.bf16.msra.mxu0 0
      %527 = vmatpush.bf16.msra.mxu0 0
      %528 = vmatpush.bf16.msra.mxu0 0
      %529 = vmatpush.bf16.msra.mxu0 %v473
      %530 = vmatpush.bf16.msra.mxu0 %v470
      %531 = vmatmul.bf16.gmra.mxu0 %v483
      %v532 = vpop.f32.mrf.mxu0
      %v533 = vadd.f32 %v444, %v532
      %v534 = vpop.f32.mrf.mxu0
      %v535 = vadd.f32 %v444, %v534
      %536 = vmatmul.bf16.gmra.mxu0 %v486
      %v537 = vpop.f32.mrf.mxu0
      %v538 = vadd.f32 %v444, %v537
      %v539 = vpop.f32.mrf.mxu0
      %v540 = vadd.f32 %v444, %v539
      %541 = vmatmul.bf16.gmra.mxu0 %v489
      %v542 = vpop.f32.mrf.mxu0
      %v543 = vadd.f32 %v444, %v542
      %v544 = vpop.f32.mrf.mxu0
      %v545 = vadd.f32 %v444, %v544
      %546 = vmatmul.bf16.gmra.mxu0 %v492
      %v547 = vpop.f32.mrf.mxu0
      %v548 = vadd.f32 %v444, %v547
      %v549 = vpop.f32.mrf.mxu0
      %v550 = vadd.f32 %v444, %v549
      %551 = vdwg.mxu0
      %552 = vmatpush.bf16.msra.mxu0 0
      %553 = vmatpush.bf16.msra.mxu0 0
      %554 = vmatpush.bf16.msra.mxu0 0
      %555 = vmatpush.bf16.msra.mxu0 0
      %556 = vmatpush.bf16.msra.mxu0 0
      %557 = vmatpush.bf16.msra.mxu0 0
      %558 = vmatpush.bf16.msra.mxu0 %v474
      %559 = vmatpush.bf16.msra.mxu0 %v471
      %560 = vmatmul.bf16.gmra.mxu0 %v483
      %v561 = vpop.f32.mrf.mxu0
      %v562 = vadd.f32 %v445, %v561
      %v563 = vpop.f32.mrf.mxu0
      %v564 = vadd.f32 %v445, %v563
      %565 = vmatmul.bf16.gmra.mxu0 %v486
      %v566 = vpop.f32.mrf.mxu0
      %v567 = vadd.f32 %v445, %v566
      %v568 = vpop.f32.mrf.mxu0
      %v569 = vadd.f32 %v445, %v568
      %570 = vmatmul.bf16.gmra.mxu0 %v489
      %v571 = vpop.f32.mrf.mxu0
      %v572 = vadd.f32 %v445, %v571
      %v573 = vpop.f32.mrf.mxu0
      %v574 = vadd.f32 %v445, %v573
      %575 = vmatmul.bf16.gmra.mxu0 %v492
      %v576 = vpop.f32.mrf.mxu0
      %v577 = vadd.f32 %v445, %v576
      %v578 = vpop.f32.mrf.mxu0
      %v579 = vadd.f32 %v445, %v578
      %580 = vdwg.mxu0
      %vm581 = vcmp.ge.f32.partialorder %v504, 0.0
      %vm582 = vcmp.ge.f32.partialorder %v533, 0.0
      %vm583 = vcmp.ge.f32.partialorder %v562, 0.0
      %vm584 = vcmp.ge.f32.partialorder %v506, 0.0
      %vm585 = vcmp.ge.f32.partialorder %v535, 0.0
      %vm586 = vcmp.ge.f32.partialorder %v564, 0.0
      %vm587 = vcmp.ge.f32.partialorder %v509, 0.0
      %vm588 = vcmp.ge.f32.partialorder %v538, 0.0
      %vm589 = vcmp.ge.f32.partialorder %v567, 0.0
      %vm590 = vcmp.ge.f32.partialorder %v511, 0.0
      %vm591 = vcmp.ge.f32.partialorder %v540, 0.0
      %vm592 = vcmp.ge.f32.partialorder %v569, 0.0
      %vm593 = vcmp.ge.f32.partialorder %v514, 0.0
      %vm594 = vcmp.ge.f32.partialorder %v543, 0.0
      %vm595 = vcmp.ge.f32.partialorder %v572, 0.0
      %vm596 = vcmp.ge.f32.partialorder %v516, 0.0
      %vm597 = vcmp.ge.f32.partialorder %v545, 0.0
      %vm598 = vcmp.ge.f32.partialorder %v574, 0.0
      %vm599 = vcmp.ge.f32.partialorder %v519, 0.0
      %vm600 = vcmp.ge.f32.partialorder %v548, 0.0
      %vm601 = vcmp.ge.f32.partialorder %v577, 0.0
      %vm602 = vcmp.ge.f32.partialorder %v521, 0.0
      %vm603 = vcmp.ge.f32.partialorder %v550, 0.0
      %vm604 = vcmp.ge.f32.partialorder %v579, 0.0
      %v605 = vmul.f32 %v504, 0.2
      %v606 = vmul.f32 %v533, 0.2
      %v607 = vmul.f32 %v562, 0.2
      %v608 = vmul.f32 %v506, 0.2
      %v609 = vmul.f32 %v535, 0.2
      %v610 = vmul.f32 %v564, 0.2
      %v611 = vmul.f32 %v509, 0.2
      %v612 = vmul.f32 %v538, 0.2
      %v613 = vmul.f32 %v567, 0.2
      %v614 = vmul.f32 %v511, 0.2
      %v615 = vmul.f32 %v540, 0.2
      %v616 = vmul.f32 %v569, 0.2
      %v617 = vmul.f32 %v514, 0.2
      %v618 = vmul.f32 %v543, 0.2
      %v619 = vmul.f32 %v572, 0.2
      %v620 = vmul.f32 %v516, 0.2
      %v621 = vmul.f32 %v545, 0.2
      %v622 = vmul.f32 %v574, 0.2
      %v623 = vmul.f32 %v519, 0.2
      %v624 = vmul.f32 %v548, 0.2
      %v625 = vmul.f32 %v577, 0.2
      %v626 = vmul.f32 %v521, 0.2
      %v627 = vmul.f32 %v550, 0.2
      %v628 = vmul.f32 %v579, 0.2
      %v629 = vsel %vm581, %v504, %v605
      %v630 = vsel %vm582, %v533, %v606
      %v631 = vsel %vm583, %v562, %v607
      %v632 = vsel %vm584, %v506, %v608
      %v633 = vsel %vm585, %v535, %v609
      %v634 = vsel %vm586, %v564, %v610
      %v635 = vsel %vm587, %v509, %v611
      %v636 = vsel %vm588, %v538, %v612
      %v637 = vsel %vm589, %v567, %v613
      %v638 = vsel %vm590, %v511, %v614
      %v639 = vsel %vm591, %v540, %v615
      %v640 = vsel %vm592, %v569, %v616
      %v641 = vsel %vm593, %v514, %v617
      %v642 = vsel %vm594, %v543, %v618
      %v643 = vsel %vm595, %v572, %v619
      %v644 = vsel %vm596, %v516, %v620
      %v645 = vsel %vm597, %v545, %v621
      %v646 = vsel %vm598, %v574, %v622
      %v647 = vsel %vm599, %v519, %v623
      %v648 = vsel %vm600, %v548, %v624
      %v649 = vsel %vm601, %v577, %v625
      %v650 = vsel %vm602, %v521, %v626
      %v651 = vsel %vm603, %v550, %v627
      %v652 = vsel %vm604, %v579, %v628
      %v653 = vpack.c.bf16 %v632, %v629
      %v654 = vpack.c.bf16 %v633, %v630
      %v655 = vpack.c.bf16 %v634, %v631
      %v656 = vpack.c.bf16 %v638, %v635
      %v657 = vpack.c.bf16 %v639, %v636
      %v658 = vpack.c.bf16 %v640, %v637
      %v659 = vpack.c.bf16 %v644, %v641
      %v660 = vpack.c.bf16 %v645, %v642
      %v661 = vpack.c.bf16 %v646, %v643
      %v662 = vpack.c.bf16 %v650, %v647
      %v663 = vpack.c.bf16 %v651, %v648
      %v664 = vpack.c.bf16 %v652, %v649
      %v665 = vld [vmem:[%s4] sm:$0xf]
      %v666 = vld [vmem:[%s4 + $0x4] sm:$0xf]
      %v667 = vld [vmem:[%s4 + $0x8] sm:$0xf]
      %v668 = vld [vmem:[%s4 + $0xc] sm:$0xf]
      %v669 = vld [vmem:[%s4 + $0x10] sm:$0xf]
      %v670 = vld [vmem:[%s4 + $0x14] sm:$0xf]
      %v671 = vld [vmem:[%s4 + $0x18] sm:$0xf]
      %v672 = vld [vmem:[%s4 + $0x1c] sm:$0xf]
      %v673 = vld [vmem:[%s4 + $0x20] sm:$0xf]
      %v674 = vld [vmem:[%s4 + $0x24] sm:$0xf]
      %v675 = vld [vmem:[%s4 + $0x28] sm:$0xf]
      %v676 = vld [vmem:[%s4 + $0x2c] sm:$0xf]
      %v677 = vld [vmem:[%s4 + $0x30] sm:$0xf]
      %v678 = vld [vmem:[%s4 + $0x34] sm:$0xf]
      %v679 = vld [vmem:[%s4 + $0x38] sm:$0xf]
      %v680 = vld [vmem:[%s4 + $0x3c] sm:$0xf]
      %v681 = vld [vmem:[%s4 + $0x40] sm:$0xf]
      %v682 = vld [vmem:[%s4 + $0x44] sm:$0xf]
      %v683 = vld [vmem:[%s4 + $0x48] sm:$0xf]
      %v684 = vld [vmem:[%s4 + $0x4c] sm:$0xf]
      %v685 = vld [vmem:[%s4 + $0x50] sm:$0xf]
      %v686 = vld [vmem:[%s4 + $0x54] sm:$0xf]
      %v687 = vld [vmem:[%s4 + $0x58] sm:$0xf]
      %v688 = vld [vmem:[%s4 + $0x5c] sm:$0xf]
      %v689 = vld [vmem:[%s4 + $0x60] sm:$0xf]
      %v690 = vld [vmem:[%s4 + $0x64] sm:$0xf]
      %v691 = vld [vmem:[%s4 + $0x68] sm:$0xf]
      %v692 = vld [vmem:[%s4 + $0x6c] sm:$0xf]
      %v693 = vld [vmem:[%s4 + $0x70] sm:$0xf]
      %v694 = vld [vmem:[%s4 + $0x74] sm:$0xf]
      %v695 = vld [vmem:[%s4 + $0x78] sm:$0xf]
      %v696 = vld [vmem:[%s4 + $0x7c] sm:$0xf]
      %v697 = vld [vmem:[%s4 + $0x80] sm:$0xf]
      %v698 = vld [vmem:[%s4 + $0x84] sm:$0xf]
      %v699 = vld [vmem:[%s4 + $0x88] sm:$0xf]
      %v700 = vld [vmem:[%s4 + $0x8c] sm:$0xf]
      %v701 = vld [vmem:[%s4 + $0x90] sm:$0xf]
      %v702 = vld [vmem:[%s4 + $0x94] sm:$0xf]
      %v703 = vld [vmem:[%s4 + $0x98] sm:$0xf]
      %v704 = vld [vmem:[%s4 + $0x9c] sm:$0xf]
      %v705 = vld [vmem:[%s4 + $0xa0] sm:$0xf]
      %v706 = vld [vmem:[%s4 + $0xa4] sm:$0xf]
      %v707 = vld [vmem:[%s4 + $0xa8] sm:$0xf]
      %v708 = vld [vmem:[%s4 + $0xac] sm:$0xf]
      %v709 = vld [vmem:[%s4 + $0xb0] sm:$0xf]
      %v710 = vld [vmem:[%s4 + $0xb4] sm:$0xf]
      %v711 = vld [vmem:[%s4 + $0xb8] sm:$0xf]
      %v712 = vld [vmem:[%s4 + $0xbc] sm:$0xf]
      %v713 = vld [vmem:[%s5] sm:$0x1]
      %v715 = vperm.slane %v713, 0
      %v765 = vunpack.c.l.b16 %v665
      %v766 = vunpack.c.l.b16 %v666
      %v767 = vunpack.c.l.b16 %v667
      %v768 = vunpack.c.l.b16 %v668
      %v769 = vunpack.c.l.b16 %v669
      %v770 = vunpack.c.l.b16 %v670
      %v771 = vunpack.c.l.b16 %v671
      %v772 = vunpack.c.l.b16 %v672
      %v773 = vunpack.c.l.b16 %v673
      %v774 = vunpack.c.l.b16 %v674
      %v775 = vunpack.c.l.b16 %v675
      %v776 = vunpack.c.l.b16 %v676
      %v777 = vunpack.c.l.b16 %v677
      %v778 = vunpack.c.l.b16 %v678
      %v779 = vunpack.c.l.b16 %v679
      %v780 = vunpack.c.l.b16 %v680
      %v781 = vunpack.c.l.b16 %v681
      %v782 = vunpack.c.l.b16 %v682
      %v783 = vunpack.c.l.b16 %v683
      %v784 = vunpack.c.l.b16 %v684
      %v785 = vunpack.c.l.b16 %v685
      %v786 = vunpack.c.l.b16 %v686
      %v787 = vunpack.c.l.b16 %v687
      %v788 = vunpack.c.l.b16 %v688
      %v789 = vunpack.c.l.b16 %v689
      %v790 = vunpack.c.l.b16 %v690
      %v791 = vunpack.c.l.b16 %v691
      %v792 = vunpack.c.l.b16 %v692
      %v793 = vunpack.c.l.b16 %v693
      %v794 = vunpack.c.l.b16 %v694
      %v795 = vunpack.c.l.b16 %v695
      %v796 = vunpack.c.l.b16 %v696
      %v797 = vunpack.c.l.b16 %v697
      %v798 = vunpack.c.l.b16 %v698
      %v799 = vunpack.c.l.b16 %v699
      %v800 = vunpack.c.l.b16 %v700
      %v801 = vunpack.c.l.b16 %v701
      %v802 = vunpack.c.l.b16 %v702
      %v803 = vunpack.c.l.b16 %v703
      %v804 = vunpack.c.l.b16 %v704
      %v805 = vunpack.c.l.b16 %v705
      %v806 = vunpack.c.l.b16 %v706
      %v807 = vunpack.c.l.b16 %v707
      %v808 = vunpack.c.l.b16 %v708
      %v809 = vunpack.c.l.b16 %v709
      %v810 = vunpack.c.l.b16 %v710
      %v811 = vunpack.c.l.b16 %v711
      %v812 = vunpack.c.l.b16 %v712
      %v813 = vpack.c.b16 %v766, %v765
      %v814 = vpack.c.b16 %v768, %v767
      %v815 = vpack.c.b16 %v770, %v769
      %v816 = vpack.c.b16 %v772, %v771
      %v817 = vpack.c.b16 %v774, %v773
      %v818 = vpack.c.b16 %v776, %v775
      %v819 = vpack.c.b16 %v778, %v777
      %v820 = vpack.c.b16 %v780, %v779
      %v821 = vpack.c.b16 %v782, %v781
      %v822 = vpack.c.b16 %v784, %v783
      %v823 = vpack.c.b16 %v786, %v785
      %v824 = vpack.c.b16 %v788, %v787
      %v825 = vpack.c.b16 %v790, %v789
      %v826 = vpack.c.b16 %v792, %v791
      %v827 = vpack.c.b16 %v794, %v793
      %v828 = vpack.c.b16 %v796, %v795
      %v829 = vpack.c.b16 %v798, %v797
      %v830 = vpack.c.b16 %v800, %v799
      %v831 = vpack.c.b16 %v802, %v801
      %v832 = vpack.c.b16 %v804, %v803
      %v833 = vpack.c.b16 %v806, %v805
      %v834 = vpack.c.b16 %v808, %v807
      %v835 = vpack.c.b16 %v810, %v809
      %v836 = vpack.c.b16 %v812, %v811
      %861 = vmatpush.bf16.msra.mxu0 %v820
      %862 = vmatpush.bf16.msra.mxu0 %v819
      %863 = vmatpush.bf16.msra.mxu0 %v818
      %864 = vmatpush.bf16.msra.mxu0 %v817
      %865 = vmatpush.bf16.msra.mxu0 %v816
      %866 = vmatpush.bf16.msra.mxu0 %v815
      %867 = vmatpush.bf16.msra.mxu0 %v814
      %868 = vmatpush.bf16.msra.mxu0 %v813
      %869 = vmatmul.bf16.gmra.mxu0 %v653
      %v870 = vpop.f32.mrf.mxu0
      %v871 = vadd.f32 %v715, %v870
      %v872 = vpop.f32.mrf.mxu0
      %v873 = vadd.f32 %v715, %v872
      %874 = vmatmul.bf16.gmra.mxu0 %v656
      %v875 = vpop.f32.mrf.mxu0
      %v876 = vadd.f32 %v715, %v875
      %v877 = vpop.f32.mrf.mxu0
      %v878 = vadd.f32 %v715, %v877
      %879 = vmatmul.bf16.gmra.mxu0 %v659
      %v880 = vpop.f32.mrf.mxu0
      %v881 = vadd.f32 %v715, %v880
      %v882 = vpop.f32.mrf.mxu0
      %v883 = vadd.f32 %v715, %v882
      %884 = vmatmul.bf16.gmra.mxu0 %v662
      %v885 = vpop.f32.mrf.mxu0
      %v886 = vadd.f32 %v715, %v885
      %v887 = vpop.f32.mrf.mxu0
      %v888 = vadd.f32 %v715, %v887
      %889 = vdwg.mxu0
      %890 = vmatpush.bf16.msra.mxu0 %v828
      %891 = vmatpush.bf16.msra.mxu0 %v827
      %892 = vmatpush.bf16.msra.mxu0 %v826
      %893 = vmatpush.bf16.msra.mxu0 %v825
      %894 = vmatpush.bf16.msra.mxu0 %v824
      %895 = vmatpush.bf16.msra.mxu0 %v823
      %896 = vmatpush.bf16.msra.mxu0 %v822
      %897 = vmatpush.bf16.msra.mxu0 %v821
      %898 = vmatmul.bf16.gmra.mxu0 %v654
      %v899 = vpop.f32.mrf.mxu0
      %v900 = vadd.f32 %v871, %v899
      %v901 = vpop.f32.mrf.mxu0
      %v902 = vadd.f32 %v873, %v901
      %903 = vmatmul.bf16.gmra.mxu0 %v657
      %v904 = vpop.f32.mrf.mxu0
      %v905 = vadd.f32 %v876, %v904
      %v906 = vpop.f32.mrf.mxu0
      %v907 = vadd.f32 %v878, %v906
      %908 = vmatmul.bf16.gmra.mxu0 %v660
      %v909 = vpop.f32.mrf.mxu0
      %v910 = vadd.f32 %v881, %v909
      %v911 = vpop.f32.mrf.mxu0
      %v912 = vadd.f32 %v883, %v911
      %913 = vmatmul.bf16.gmra.mxu0 %v663
      %v914 = vpop.f32.mrf.mxu0
      %v915 = vadd.f32 %v886, %v914
      %v916 = vpop.f32.mrf.mxu0
      %v917 = vadd.f32 %v888, %v916
      %918 = vdwg.mxu0
      %919 = vmatpush.bf16.msra.mxu0 %v836
      %920 = vmatpush.bf16.msra.mxu0 %v835
      %921 = vmatpush.bf16.msra.mxu0 %v834
      %922 = vmatpush.bf16.msra.mxu0 %v833
      %923 = vmatpush.bf16.msra.mxu0 %v832
      %924 = vmatpush.bf16.msra.mxu0 %v831
      %925 = vmatpush.bf16.msra.mxu0 %v830
      %926 = vmatpush.bf16.msra.mxu0 %v829
      %927 = vmatmul.bf16.gmra.mxu0 %v655
      %v928 = vpop.f32.mrf.mxu0
      %v929 = vadd.f32 %v900, %v928
      %v930 = vpop.f32.mrf.mxu0
      %v931 = vadd.f32 %v902, %v930
      %932 = vmatmul.bf16.gmra.mxu0 %v658
      %v933 = vpop.f32.mrf.mxu0
      %v934 = vadd.f32 %v905, %v933
      %v935 = vpop.f32.mrf.mxu0
      %v936 = vadd.f32 %v907, %v935
      %937 = vmatmul.bf16.gmra.mxu0 %v661
      %v938 = vpop.f32.mrf.mxu0
      %v939 = vadd.f32 %v910, %v938
      %v940 = vpop.f32.mrf.mxu0
      %v941 = vadd.f32 %v912, %v940
      %942 = vmatmul.bf16.gmra.mxu0 %v664
      %v943 = vpop.f32.mrf.mxu0
      %v944 = vadd.f32 %v915, %v943
      %v945 = vpop.f32.mrf.mxu0
      %v946 = vadd.f32 %v917, %v945
      %947 = vdwg.mxu0
      %v948 = vmax.f32 %v929, 0.0
      %v949 = vmax.f32 %v931, 0.0
      %v950 = vmax.f32 %v934, 0.0
      %v951 = vmax.f32 %v936, 0.0
      %v952 = vmax.f32 %v939, 0.0
      %v953 = vmax.f32 %v941, 0.0
      %v954 = vmax.f32 %v944, 0.0
      %v955 = vmax.f32 %v946, 0.0
      %v956 = vand.u32 2147483647, %v929
      %v957 = vand.u32 2147483647, %v931
      %v958 = vand.u32 2147483647, %v934
      %v959 = vand.u32 2147483647, %v936
      %v960 = vand.u32 2147483647, %v939
      %v961 = vand.u32 2147483647, %v941
      %v962 = vand.u32 2147483647, %v944
      %v963 = vand.u32 2147483647, %v946
      %v964 = vsub.f32 0.0, %v956
      %v965 = vsub.f32 0.0, %v957
      %v966 = vsub.f32 0.0, %v958
      %v967 = vsub.f32 0.0, %v959
      %v968 = vsub.f32 0.0, %v960
      %v969 = vsub.f32 0.0, %v961
      %v970 = vsub.f32 0.0, %v962
      %v971 = vsub.f32 0.0, %v963
      %v972 = vmul.f32 %v964, 1.442695
      %v973 = vpow.pop %v972
      %v974 = vmul.f32 %v965, 1.442695
      %v975 = vpow.pop %v974
      %v976 = vmul.f32 %v966, 1.442695
      %v977 = vpow.pop %v976
      %v978 = vmul.f32 %v967, 1.442695
      %v979 = vpow.pop %v978
      %v980 = vmul.f32 %v968, 1.442695
      %v981 = vpow.pop %v980
      %v982 = vmul.f32 %v969, 1.442695
      %v983 = vpow.pop %v982
      %v984 = vmul.f32 %v970, 1.442695
      %v985 = vpow.pop %v984
      %v986 = vmul.f32 %v971, 1.442695
      %v987 = vpow.pop %v986
      %v988 = vadd.f32 %v973, 1.0
      %v989 = vlog2.pop %v988
      %v990 = vmul.f32 %v989, 0.6931472
      %v991 = vmul.f32 -0.5, %v973
      %v992 = vadd.f32 %v991, 1.0
      %v993 = vmul.f32 %v992, %v973
      %v994 = vand.u32 2147483647, %v973
      %vm995 = vcmp.lt.f32.partialorder %v994, 0.0004427343
      %v996 = vsel %vm995, %v993, %v990
      %v997 = vadd.f32 %v975, 1.0
      %v998 = vlog2.pop %v997
      %v999 = vmul.f32 %v998, 0.6931472
      %v1000 = vmul.f32 -0.5, %v975
      %v1001 = vadd.f32 %v1000, 1.0
      %v1002 = vmul.f32 %v1001, %v975
      %v1003 = vand.u32 2147483647, %v975
      %vm1004 = vcmp.lt.f32.partialorder %v1003, 0.0004427343
      %v1005 = vsel %vm1004, %v1002, %v999
      %v1006 = vadd.f32 %v977, 1.0
      %v1007 = vlog2.pop %v1006
      %v1008 = vmul.f32 %v1007, 0.6931472
      %v1009 = vmul.f32 -0.5, %v977
      %v1010 = vadd.f32 %v1009, 1.0
      %v1011 = vmul.f32 %v1010, %v977
      %v1012 = vand.u32 2147483647, %v977
      %vm1013 = vcmp.lt.f32.partialorder %v1012, 0.0004427343
      %v1014 = vsel %vm1013, %v1011, %v1008
      %v1015 = vadd.f32 %v979, 1.0
      %v1016 = vlog2.pop %v1015
      %v1017 = vmul.f32 %v1016, 0.6931472
      %v1018 = vmul.f32 -0.5, %v979
      %v1019 = vadd.f32 %v1018, 1.0
      %v1020 = vmul.f32 %v1019, %v979
      %v1021 = vand.u32 2147483647, %v979
      %vm1022 = vcmp.lt.f32.partialorder %v1021, 0.0004427343
      %v1023 = vsel %vm1022, %v1020, %v1017
      %v1024 = vadd.f32 %v981, 1.0
      %v1025 = vlog2.pop %v1024
      %v1026 = vmul.f32 %v1025, 0.6931472
      %v1027 = vmul.f32 -0.5, %v981
      %v1028 = vadd.f32 %v1027, 1.0
      %v1029 = vmul.f32 %v1028, %v981
      %v1030 = vand.u32 2147483647, %v981
      %vm1031 = vcmp.lt.f32.partialorder %v1030, 0.0004427343
      %v1032 = vsel %vm1031, %v1029, %v1026
      %v1033 = vadd.f32 %v983, 1.0
      %v1034 = vlog2.pop %v1033
      %v1035 = vmul.f32 %v1034, 0.6931472
      %v1036 = vmul.f32 -0.5, %v983
      %v1037 = vadd.f32 %v1036, 1.0
      %v1038 = vmul.f32 %v1037, %v983
      %v1039 = vand.u32 2147483647, %v983
      %vm1040 = vcmp.lt.f32.partialorder %v1039, 0.0004427343
      %v1041 = vsel %vm1040, %v1038, %v1035
      %v1042 = vadd.f32 %v985, 1.0
      %v1043 = vlog2.pop %v1042
      %v1044 = vmul.f32 %v1043, 0.6931472
      %v1045 = vmul.f32 -0.5, %v985
      %v1046 = vadd.f32 %v1045, 1.0
      %v1047 = vmul.f32 %v1046, %v985
      %v1048 = vand.u32 2147483647, %v985
      %vm1049 = vcmp.lt.f32.partialorder %v1048, 0.0004427343
      %v1050 = vsel %vm1049, %v1047, %v1044
      %v1051 = vadd.f32 %v987, 1.0
      %v1052 = vlog2.pop %v1051
      %v1053 = vmul.f32 %v1052, 0.6931472
      %v1054 = vmul.f32 -0.5, %v987
      %v1055 = vadd.f32 %v1054, 1.0
      %v1056 = vmul.f32 %v1055, %v987
      %v1057 = vand.u32 2147483647, %v987
      %vm1058 = vcmp.lt.f32.partialorder %v1057, 0.0004427343
      %v1059 = vsel %vm1058, %v1056, %v1053
      %v1060 = vadd.f32 %v948, %v996
      %v1061 = vadd.f32 %v949, %v1005
      %v1062 = vadd.f32 %v950, %v1014
      %v1063 = vadd.f32 %v951, %v1023
      %v1064 = vadd.f32 %v952, %v1032
      %v1065 = vadd.f32 %v953, %v1041
      %v1066 = vadd.f32 %v954, %v1050
      %v1067 = vadd.f32 %v955, %v1059
      %v1068 = vrsqrt.pop %v1060
      %v1069 = vmul.f32 %v1068, %v1060
      %v1070 = vmul.f32 %v1069, %v1068
      %v1071 = vmul.f32 0.5, %v1070
      %v1072 = vsub.f32 1.5, %v1071
      %v1073 = vmul.f32 %v1068, %v1072
      %v1074 = vmul.f32 %v1060, %v1073
      %vm1075 = vcmp.eq.f32.partialorder %v1060, inf
      %v1076 = vsel %vm1075, %v1060, %v1074
      %vm1077 = vcmp.eq.f32.partialorder %v1060, 0.0
      %v1078 = vand.u32 %v1060, 2147483648
      %v1079 = vsel %vm1077, %v1078, %v1076
      %v1080 = vrsqrt.pop %v1061
      %v1081 = vmul.f32 %v1080, %v1061
      %v1082 = vmul.f32 %v1081, %v1080
      %v1083 = vmul.f32 0.5, %v1082
      %v1084 = vsub.f32 1.5, %v1083
      %v1085 = vmul.f32 %v1080, %v1084
      %v1086 = vmul.f32 %v1061, %v1085
      %vm1087 = vcmp.eq.f32.partialorder %v1061, inf
      %v1088 = vsel %vm1087, %v1061, %v1086
      %vm1089 = vcmp.eq.f32.partialorder %v1061, 0.0
      %v1090 = vand.u32 %v1061, 2147483648
      %v1091 = vsel %vm1089, %v1090, %v1088
      %v1092 = vrsqrt.pop %v1062
      %v1093 = vmul.f32 %v1092, %v1062
      %v1094 = vmul.f32 %v1093, %v1092
      %v1095 = vmul.f32 0.5, %v1094
      %v1096 = vsub.f32 1.5, %v1095
      %v1097 = vmul.f32 %v1092, %v1096
      %v1098 = vmul.f32 %v1062, %v1097
      %vm1099 = vcmp.eq.f32.partialorder %v1062, inf
      %v1100 = vsel %vm1099, %v1062, %v1098
      %vm1101 = vcmp.eq.f32.partialorder %v1062, 0.0
      %v1102 = vand.u32 %v1062, 2147483648
      %v1103 = vsel %vm1101, %v1102, %v1100
      %v1104 = vrsqrt.pop %v1063
      %v1105 = vmul.f32 %v1104, %v1063
      %v1106 = vmul.f32 %v1105, %v1104
      %v1107 = vmul.f32 0.5, %v1106
      %v1108 = vsub.f32 1.5, %v1107
      %v1109 = vmul.f32 %v1104, %v1108
      %v1110 = vmul.f32 %v1063, %v1109
      %vm1111 = vcmp.eq.f32.partialorder %v1063, inf
      %v1112 = vsel %vm1111, %v1063, %v1110
      %vm1113 = vcmp.eq.f32.partialorder %v1063, 0.0
      %v1114 = vand.u32 %v1063, 2147483648
      %v1115 = vsel %vm1113, %v1114, %v1112
      %v1116 = vrsqrt.pop %v1064
      %v1117 = vmul.f32 %v1116, %v1064
      %v1118 = vmul.f32 %v1117, %v1116
      %v1119 = vmul.f32 0.5, %v1118
      %v1120 = vsub.f32 1.5, %v1119
      %v1121 = vmul.f32 %v1116, %v1120
      %v1122 = vmul.f32 %v1064, %v1121
      %vm1123 = vcmp.eq.f32.partialorder %v1064, inf
      %v1124 = vsel %vm1123, %v1064, %v1122
      %vm1125 = vcmp.eq.f32.partialorder %v1064, 0.0
      %v1126 = vand.u32 %v1064, 2147483648
      %v1127 = vsel %vm1125, %v1126, %v1124
      %v1128 = vrsqrt.pop %v1065
      %v1129 = vmul.f32 %v1128, %v1065
      %v1130 = vmul.f32 %v1129, %v1128
      %v1131 = vmul.f32 0.5, %v1130
      %v1132 = vsub.f32 1.5, %v1131
      %v1133 = vmul.f32 %v1128, %v1132
      %v1134 = vmul.f32 %v1065, %v1133
      %vm1135 = vcmp.eq.f32.partialorder %v1065, inf
      %v1136 = vsel %vm1135, %v1065, %v1134
      %vm1137 = vcmp.eq.f32.partialorder %v1065, 0.0
      %v1138 = vand.u32 %v1065, 2147483648
      %v1139 = vsel %vm1137, %v1138, %v1136
      %v1140 = vrsqrt.pop %v1066
      %v1141 = vmul.f32 %v1140, %v1066
      %v1142 = vmul.f32 %v1141, %v1140
      %v1143 = vmul.f32 0.5, %v1142
      %v1144 = vsub.f32 1.5, %v1143
      %v1145 = vmul.f32 %v1140, %v1144
      %v1146 = vmul.f32 %v1066, %v1145
      %vm1147 = vcmp.eq.f32.partialorder %v1066, inf
      %v1148 = vsel %vm1147, %v1066, %v1146
      %vm1149 = vcmp.eq.f32.partialorder %v1066, 0.0
      %v1150 = vand.u32 %v1066, 2147483648
      %v1151 = vsel %vm1149, %v1150, %v1148
      %v1152 = vrsqrt.pop %v1067
      %v1153 = vmul.f32 %v1152, %v1067
      %v1154 = vmul.f32 %v1153, %v1152
      %v1155 = vmul.f32 0.5, %v1154
      %v1156 = vsub.f32 1.5, %v1155
      %v1157 = vmul.f32 %v1152, %v1156
      %v1158 = vmul.f32 %v1067, %v1157
      %vm1159 = vcmp.eq.f32.partialorder %v1067, inf
      %v1160 = vsel %vm1159, %v1067, %v1158
      %vm1161 = vcmp.eq.f32.partialorder %v1067, 0.0
      %v1162 = vand.u32 %v1067, 2147483648
      %v1163 = vsel %vm1161, %v1162, %v1160
      %1172 = vrot.lane.b32.xlu0 %v1079, 120
      %v1173 = vpop.permute.xlu0 %1172
      %1174 = vrot.lane.b32.xlu0 %v1091, 120
      %v1175 = vpop.permute.xlu0 %1174
      %1176 = vrot.lane.b32.xlu0 %v1103, 120
      %v1177 = vpop.permute.xlu0 %1176
      %1178 = vrot.lane.b32.xlu0 %v1115, 120
      %v1179 = vpop.permute.xlu0 %1178
      %1180 = vrot.lane.b32.xlu0 %v1127, 120
      %v1181 = vpop.permute.xlu0 %1180
      %1182 = vrot.lane.b32.xlu0 %v1139, 120
      %v1183 = vpop.permute.xlu0 %1182
      %1184 = vrot.lane.b32.xlu0 %v1151, 120
      %v1185 = vpop.permute.xlu0 %1184
      %1186 = vrot.lane.b32.xlu0 %v1163, 120
      %v1187 = vpop.permute.xlu0 %1186
      %v1196 = vmul.f32 %v421, %v1173
      %v1197 = vmul.f32 %v422, %v1175
      %v1198 = vmul.f32 %v423, %v1177
      %v1199 = vmul.f32 %v424, %v1179
      %v1200 = vmul.f32 %v425, %v1181
      %v1201 = vmul.f32 %v426, %v1183
      %v1202 = vmul.f32 %v427, %v1185
      %v1203 = vmul.f32 %v428, %v1187
      %v1204 = vadd.f32 %v1196, %v929
      %v1205 = vadd.f32 %v1197, %v931
      %v1206 = vadd.f32 %v1198, %v934
      %v1207 = vadd.f32 %v1199, %v936
      %v1208 = vadd.f32 %v1200, %v939
      %v1209 = vadd.f32 %v1201, %v941
      %v1210 = vadd.f32 %v1202, %v944
      %v1211 = vadd.f32 %v1203, %v946
      %v1212 = vld [vmem:[%s6] sm:$0x1]
      %vm1213 = vcmask 195712
      %v1214 = vsel %vm1213, %v929, -inf
      %1215 = vmax.xlane.f32.xlu0 %v1214
      %v1216 = vpop.xlane.xlu0 %1215
      %v1217 = vsel %vm1213, %v931, -inf
      %1218 = vmax.xlane.f32.xlu0 %v1217
      %v1219 = vpop.xlane.xlu0 %1218
      %v1220 = vsel %vm1213, %v934, -inf
      %1221 = vmax.xlane.f32.xlu0 %v1220
      %v1222 = vpop.xlane.xlu0 %1221
      %v1223 = vsel %vm1213, %v936, -inf
      %1224 = vmax.xlane.f32.xlu0 %v1223
      %v1225 = vpop.xlane.xlu0 %1224
      %v1226 = vsel %vm1213, %v939, -inf
      %1227 = vmax.xlane.f32.xlu0 %v1226
      %v1228 = vpop.xlane.xlu0 %1227
      %v1229 = vsel %vm1213, %v941, -inf
      %1230 = vmax.xlane.f32.xlu0 %v1229
      %v1231 = vpop.xlane.xlu0 %1230
      %v1232 = vsel %vm1213, %v944, -inf
      %1233 = vmax.xlane.f32.xlu0 %v1232
      %v1234 = vpop.xlane.xlu0 %1233
      %v1235 = vsel %vm1213, %v946, -inf
      %1236 = vmax.xlane.f32.xlu0 %v1235
      %v1237 = vpop.xlane.xlu0 %1236
      %v1238 = vsub.f32 %v929, %v1216
      %v1239 = vsub.f32 %v931, %v1219
      %v1240 = vsub.f32 %v934, %v1222
      %v1241 = vsub.f32 %v936, %v1225
      %v1242 = vsub.f32 %v939, %v1228
      %v1243 = vsub.f32 %v941, %v1231
      %v1244 = vsub.f32 %v944, %v1234
      %v1245 = vsub.f32 %v946, %v1237
      %v1246 = vmul.f32 %v1238, 1.442695
      %v1247 = vpow.pop %v1246
      %v1248 = vmul.f32 %v1239, 1.442695
      %v1249 = vpow.pop %v1248
      %v1250 = vmul.f32 %v1240, 1.442695
      %v1251 = vpow.pop %v1250
      %v1252 = vmul.f32 %v1241, 1.442695
      %v1253 = vpow.pop %v1252
      %v1254 = vmul.f32 %v1242, 1.442695
      %v1255 = vpow.pop %v1254
      %v1256 = vmul.f32 %v1243, 1.442695
      %v1257 = vpow.pop %v1256
      %v1258 = vmul.f32 %v1244, 1.442695
      %v1259 = vpow.pop %v1258
      %v1260 = vmul.f32 %v1245, 1.442695
      %v1261 = vpow.pop %v1260
      %1270 = vrot.lane.b32.xlu0 %v1247, 112
      %v1271 = vpop.permute.xlu0 %1270
      %1272 = vrot.lane.b32.xlu0 %v1249, 112
      %v1273 = vpop.permute.xlu0 %1272
      %1274 = vrot.lane.b32.xlu0 %v1251, 112
      %v1275 = vpop.permute.xlu0 %1274
      %1276 = vrot.lane.b32.xlu0 %v1253, 112
      %v1277 = vpop.permute.xlu0 %1276
      %1278 = vrot.lane.b32.xlu0 %v1255, 112
      %v1279 = vpop.permute.xlu0 %1278
      %1280 = vrot.lane.b32.xlu0 %v1257, 112
      %v1281 = vpop.permute.xlu0 %1280
      %1282 = vrot.lane.b32.xlu0 %v1259, 112
      %v1283 = vpop.permute.xlu0 %1282
      %1284 = vrot.lane.b32.xlu0 %v1261, 112
      %v1285 = vpop.permute.xlu0 %1284
      %vm1294 = vcmask 64512
      %v1295 = vsel %vm1294, %v1271, 0.0
      %1296 = vadd.xlane.f32.xlu0 %v1295
      %v1297 = vpop.xlane.xlu0 %1296
      %v1298 = vsel %vm1294, %v1273, 0.0
      %1299 = vadd.xlane.f32.xlu0 %v1298
      %v1300 = vpop.xlane.xlu0 %1299
      %v1301 = vsel %vm1294, %v1275, 0.0
      %1302 = vadd.xlane.f32.xlu0 %v1301
      %v1303 = vpop.xlane.xlu0 %1302
      %v1304 = vsel %vm1294, %v1277, 0.0
      %1305 = vadd.xlane.f32.xlu0 %v1304
      %v1306 = vpop.xlane.xlu0 %1305
      %v1307 = vsel %vm1294, %v1279, 0.0
      %1308 = vadd.xlane.f32.xlu0 %v1307
      %v1309 = vpop.xlane.xlu0 %1308
      %v1310 = vsel %vm1294, %v1281, 0.0
      %1311 = vadd.xlane.f32.xlu0 %v1310
      %v1312 = vpop.xlane.xlu0 %1311
      %v1313 = vsel %vm1294, %v1283, 0.0
      %1314 = vadd.xlane.f32.xlu0 %v1313
      %v1315 = vpop.xlane.xlu0 %1314
      %v1316 = vsel %vm1294, %v1285, 0.0
      %1317 = vadd.xlane.f32.xlu0 %v1316
      %v1318 = vpop.xlane.xlu0 %1317
      %v1319 = vrcp.pop %v1297
      %v1320 = vmul.f32 %v1297, %v1319
      %v1321 = vsub.f32 1.0, %v1320
      %v1322 = vmul.f32 %v1319, %v1321
      %v1323 = vadd.f32 %v1319, %v1322
      %vm1324 = vweird.f32 %v1297
      %vm1325 = vweird.f32 %v1319
      %vm1326 = vmor %vm1324, %vm1325
      %v1327 = vsel %vm1326, %v1319, %v1323
      %v1328 = vand.u32 2147483647, %v1297
      %vm1329 = vcmp.eq.f32.partialorder %v1328, 8.507059e+37
      %v1330 = vand.u32 %v1297, 2147483648
      %v1331 = vor.u32 1.1754944e-38, %v1330
      %v1332 = vsel %vm1329, %v1331, %v1327
      %v1333 = vmul.f32 %v1247, %v1332
      %v1334 = vrcp.pop %v1300
      %v1335 = vmul.f32 %v1300, %v1334
      %v1336 = vsub.f32 1.0, %v1335
      %v1337 = vmul.f32 %v1334, %v1336
      %v1338 = vadd.f32 %v1334, %v1337
      %vm1339 = vweird.f32 %v1300
      %vm1340 = vweird.f32 %v1334
      %vm1341 = vmor %vm1339, %vm1340
      %v1342 = vsel %vm1341, %v1334, %v1338
      %v1343 = vand.u32 2147483647, %v1300
      %vm1344 = vcmp.eq.f32.partialorder %v1343, 8.507059e+37
      %v1345 = vand.u32 %v1300, 2147483648
      %v1346 = vor.u32 1.1754944e-38, %v1345
      %v1347 = vsel %vm1344, %v1346, %v1342
      %v1348 = vmul.f32 %v1249, %v1347
      %v1349 = vrcp.pop %v1303
      %v1350 = vmul.f32 %v1303, %v1349
      %v1351 = vsub.f32 1.0, %v1350
      %v1352 = vmul.f32 %v1349, %v1351
      %v1353 = vadd.f32 %v1349, %v1352
      %vm1354 = vweird.f32 %v1303
      %vm1355 = vweird.f32 %v1349
      %vm1356 = vmor %vm1354, %vm1355
      %v1357 = vsel %vm1356, %v1349, %v1353
      %v1358 = vand.u32 2147483647, %v1303
      %vm1359 = vcmp.eq.f32.partialorder %v1358, 8.507059e+37
      %v1360 = vand.u32 %v1303, 2147483648
      %v1361 = vor.u32 1.1754944e-38, %v1360
      %v1362 = vsel %vm1359, %v1361, %v1357
      %v1363 = vmul.f32 %v1251, %v1362
      %v1364 = vrcp.pop %v1306
      %v1365 = vmul.f32 %v1306, %v1364
      %v1366 = vsub.f32 1.0, %v1365
      %v1367 = vmul.f32 %v1364, %v1366
      %v1368 = vadd.f32 %v1364, %v1367
      %vm1369 = vweird.f32 %v1306
      %vm1370 = vweird.f32 %v1364
      %vm1371 = vmor %vm1369, %vm1370
      %v1372 = vsel %vm1371, %v1364, %v1368
      %v1373 = vand.u32 2147483647, %v1306
      %vm1374 = vcmp.eq.f32.partialorder %v1373, 8.507059e+37
      %v1375 = vand.u32 %v1306, 2147483648
      %v1376 = vor.u32 1.1754944e-38, %v1375
      %v1377 = vsel %vm1374, %v1376, %v1372
      %v1378 = vmul.f32 %v1253, %v1377
      %v1379 = vrcp.pop %v1309
      %v1380 = vmul.f32 %v1309, %v1379
      %v1381 = vsub.f32 1.0, %v1380
      %v1382 = vmul.f32 %v1379, %v1381
      %v1383 = vadd.f32 %v1379, %v1382
      %vm1384 = vweird.f32 %v1309
      %vm1385 = vweird.f32 %v1379
      %vm1386 = vmor %vm1384, %vm1385
      %v1387 = vsel %vm1386, %v1379, %v1383
      %v1388 = vand.u32 2147483647, %v1309
      %vm1389 = vcmp.eq.f32.partialorder %v1388, 8.507059e+37
      %v1390 = vand.u32 %v1309, 2147483648
      %v1391 = vor.u32 1.1754944e-38, %v1390
      %v1392 = vsel %vm1389, %v1391, %v1387
      %v1393 = vmul.f32 %v1255, %v1392
      %v1394 = vrcp.pop %v1312
      %v1395 = vmul.f32 %v1312, %v1394
      %v1396 = vsub.f32 1.0, %v1395
      %v1397 = vmul.f32 %v1394, %v1396
      %v1398 = vadd.f32 %v1394, %v1397
      %vm1399 = vweird.f32 %v1312
      %vm1400 = vweird.f32 %v1394
      %vm1401 = vmor %vm1399, %vm1400
      %v1402 = vsel %vm1401, %v1394, %v1398
      %v1403 = vand.u32 2147483647, %v1312
      %vm1404 = vcmp.eq.f32.partialorder %v1403, 8.507059e+37
      %v1405 = vand.u32 %v1312, 2147483648
      %v1406 = vor.u32 1.1754944e-38, %v1405
      %v1407 = vsel %vm1404, %v1406, %v1402
      %v1408 = vmul.f32 %v1257, %v1407
      %v1409 = vrcp.pop %v1315
      %v1410 = vmul.f32 %v1315, %v1409
      %v1411 = vsub.f32 1.0, %v1410
      %v1412 = vmul.f32 %v1409, %v1411
      %v1413 = vadd.f32 %v1409, %v1412
      %vm1414 = vweird.f32 %v1315
      %vm1415 = vweird.f32 %v1409
      %vm1416 = vmor %vm1414, %vm1415
      %v1417 = vsel %vm1416, %v1409, %v1413
      %v1418 = vand.u32 2147483647, %v1315
      %vm1419 = vcmp.eq.f32.partialorder %v1418, 8.507059e+37
      %v1420 = vand.u32 %v1315, 2147483648
      %v1421 = vor.u32 1.1754944e-38, %v1420
      %v1422 = vsel %vm1419, %v1421, %v1417
      %v1423 = vmul.f32 %v1259, %v1422
      %v1424 = vrcp.pop %v1318
      %v1425 = vmul.f32 %v1318, %v1424
      %v1426 = vsub.f32 1.0, %v1425
      %v1427 = vmul.f32 %v1424, %v1426
      %v1428 = vadd.f32 %v1424, %v1427
      %vm1429 = vweird.f32 %v1318
      %vm1430 = vweird.f32 %v1424
      %vm1431 = vmor %vm1429, %vm1430
      %v1432 = vsel %vm1431, %v1424, %v1428
      %v1433 = vand.u32 2147483647, %v1318
      %vm1434 = vcmp.eq.f32.partialorder %v1433, 8.507059e+37
      %v1435 = vand.u32 %v1318, 2147483648
      %v1436 = vor.u32 1.1754944e-38, %v1435
      %v1437 = vsel %vm1434, %v1436, %v1432
      %v1438 = vmul.f32 %v1261, %v1437
      %v1440 = vperm.slane %v1212, 0
      %1441 = vrot.lane.b32.xlu0 %v1440, 16
      %v1442 = vpop.permute.xlu0 %1441
      %v1444 = vmul.f32 %v413, %v1442
      %v1445 = vmul.f32 %v414, %v1442
      %v1446 = vmul.f32 %v415, %v1442
      %v1447 = vmul.f32 %v416, %v1442
      %v1448 = vmul.f32 %v417, %v1442
      %v1449 = vmul.f32 %v418, %v1442
      %v1450 = vmul.f32 %v419, %v1442
      %v1451 = vmul.f32 %v420, %v1442
      %1460 = vrot.lane.b32.xlu0 %v1444, 112
      %v1461 = vpop.permute.xlu0 %1460
      %1462 = vrot.lane.b32.xlu0 %v1445, 112
      %v1463 = vpop.permute.xlu0 %1462
      %1464 = vrot.lane.b32.xlu0 %v1446, 112
      %v1465 = vpop.permute.xlu0 %1464
      %1466 = vrot.lane.b32.xlu0 %v1447, 112
      %v1467 = vpop.permute.xlu0 %1466
      %1468 = vrot.lane.b32.xlu0 %v1448, 112
      %v1469 = vpop.permute.xlu0 %1468
      %1470 = vrot.lane.b32.xlu0 %v1449, 112
      %v1471 = vpop.permute.xlu0 %1470
      %1472 = vrot.lane.b32.xlu0 %v1450, 112
      %v1473 = vpop.permute.xlu0 %1472
      %1474 = vrot.lane.b32.xlu0 %v1451, 112
      %v1475 = vpop.permute.xlu0 %1474
      %v1484 = vsel %vm1294, %v1461, 0.0
      %1485 = vadd.xlane.f32.xlu0 %v1484
      %v1486 = vpop.xlane.xlu0 %1485
      %v1487 = vsel %vm1294, %v1463, 0.0
      %1488 = vadd.xlane.f32.xlu0 %v1487
      %v1489 = vpop.xlane.xlu0 %1488
      %v1490 = vsel %vm1294, %v1465, 0.0
      %1491 = vadd.xlane.f32.xlu0 %v1490
      %v1492 = vpop.xlane.xlu0 %1491
      %v1493 = vsel %vm1294, %v1467, 0.0
      %1494 = vadd.xlane.f32.xlu0 %v1493
      %v1495 = vpop.xlane.xlu0 %1494
      %v1496 = vsel %vm1294, %v1469, 0.0
      %1497 = vadd.xlane.f32.xlu0 %v1496
      %v1498 = vpop.xlane.xlu0 %1497
      %v1499 = vsel %vm1294, %v1471, 0.0
      %1500 = vadd.xlane.f32.xlu0 %v1499
      %v1501 = vpop.xlane.xlu0 %1500
      %v1502 = vsel %vm1294, %v1473, 0.0
      %1503 = vadd.xlane.f32.xlu0 %v1502
      %v1504 = vpop.xlane.xlu0 %1503
      %v1505 = vsel %vm1294, %v1475, 0.0
      %1506 = vadd.xlane.f32.xlu0 %v1505
      %v1507 = vpop.xlane.xlu0 %1506
      %v1508 = vmul.f32 %v1333, %v1486
      %v1509 = vmul.f32 %v1348, %v1489
      %v1510 = vmul.f32 %v1363, %v1492
      %v1511 = vmul.f32 %v1378, %v1495
      %v1512 = vmul.f32 %v1393, %v1498
      %v1513 = vmul.f32 %v1408, %v1501
      %v1514 = vmul.f32 %v1423, %v1504
      %v1515 = vmul.f32 %v1438, %v1507
      %1524 = vrot.lane.b32.xlu0 %v1508, 112
      %v1525 = vpop.permute.xlu0 %1524
      %1526 = vrot.lane.b32.xlu0 %v1509, 112
      %v1527 = vpop.permute.xlu0 %1526
      %1528 = vrot.lane.b32.xlu0 %v1510, 112
      %v1529 = vpop.permute.xlu0 %1528
      %1530 = vrot.lane.b32.xlu0 %v1511, 112
      %v1531 = vpop.permute.xlu0 %1530
      %1532 = vrot.lane.b32.xlu0 %v1512, 112
      %v1533 = vpop.permute.xlu0 %1532
      %1534 = vrot.lane.b32.xlu0 %v1513, 112
      %v1535 = vpop.permute.xlu0 %1534
      %1536 = vrot.lane.b32.xlu0 %v1514, 112
      %v1537 = vpop.permute.xlu0 %1536
      %1538 = vrot.lane.b32.xlu0 %v1515, 112
      %v1539 = vpop.permute.xlu0 %1538
      %v1548 = vadd.f32 %v1204, %v1525
      %v1549 = vadd.f32 %v1205, %v1527
      %v1550 = vadd.f32 %v1206, %v1529
      %v1551 = vadd.f32 %v1207, %v1531
      %v1552 = vadd.f32 %v1208, %v1533
      %v1553 = vadd.f32 %v1209, %v1535
      %v1554 = vadd.f32 %v1210, %v1537
      %v1555 = vadd.f32 %v1211, %v1539
      %1564 = vrot.lane.b32.xlu0 %v1204, 8
      %v1565 = vpop.permute.xlu0 %1564
      %1566 = vrot.lane.b32.xlu0 %v1205, 8
      %v1567 = vpop.permute.xlu0 %1566
      %1568 = vrot.lane.b32.xlu0 %v1206, 8
      %v1569 = vpop.permute.xlu0 %1568
      %1570 = vrot.lane.b32.xlu0 %v1207, 8
      %v1571 = vpop.permute.xlu0 %1570
      %1572 = vrot.lane.b32.xlu0 %v1208, 8
      %v1573 = vpop.permute.xlu0 %1572
      %1574 = vrot.lane.b32.xlu0 %v1209, 8
      %v1575 = vpop.permute.xlu0 %1574
      %1576 = vrot.lane.b32.xlu0 %v1210, 8
      %v1577 = vpop.permute.xlu0 %1576
      %1578 = vrot.lane.b32.xlu0 %v1211, 8
      %v1579 = vpop.permute.xlu0 %1578
      %v1588 = vsel %vm1294, %v1548, %v1565
      %v1589 = vsel %vm1294, %v1549, %v1567
      %v1590 = vsel %vm1294, %v1550, %v1569
      %v1591 = vsel %vm1294, %v1551, %v1571
      %v1592 = vsel %vm1294, %v1552, %v1573
      %v1593 = vsel %vm1294, %v1553, %v1575
      %v1594 = vsel %vm1294, %v1554, %v1577
      %v1595 = vsel %vm1294, %v1555, %v1579
      %v1596 = vpack.c.bf16 %v1589, %v1588
      %v1597 = vpack.c.bf16 %v1591, %v1590
      %v1598 = vpack.c.bf16 %v1593, %v1592
      %v1599 = vpack.c.bf16 %v1595, %v1594
      %v1600 = vld [vmem:[%s7] sm:$0xff]
      %v1601 = vld [vmem:[%s7 + $0x8] sm:$0xff]
      %v1602 = vld [vmem:[%s8] sm:$0x3]
      %v1604 = vperm.slane %v1602, 0
      %v1605 = vperm.slane %v1602, 1
      %v1610 = vunpack.c.l.b16 %v1600
      %v1611 = vunpack.c.h.b16 %v1600
      %v1612 = vunpack.c.l.b16 %v1601
      %v1613 = vunpack.c.h.b16 %v1601
      %v1614 = vpack.c.b16 %v1612, %v1610
      %v1615 = vpack.c.b16 %v1613, %v1611
      %vm1618 = vcmask 130048
      %v1620 = vsel %vm1618, %v1596, 0
      %v1623 = vsel %vm1618, %v1597, 0
      %v1626 = vsel %vm1618, %v1598, 0
      %v1629 = vsel %vm1618, %v1599, 0
      %1631 = vmatpush.bf16.msra.mxu0 0
      %1632 = vmatpush.bf16.msra.mxu0 0
      %1633 = vmatpush.bf16.msra.mxu0 0
      %1634 = vmatpush.bf16.msra.mxu0 0
      %1635 = vmatpush.bf16.msra.mxu0 0
      %1636 = vmatpush.bf16.msra.mxu0 0
      %1637 = vmatpush.bf16.msra.mxu0 0
      %1638 = vmatpush.bf16.msra.mxu0 %v1614
      %1639 = vmatmul.bf16.gmra.mxu0 %v1620
      %v1640 = vpop.f32.mrf.mxu0
      %v1641 = vadd.f32 %v1604, %v1640
      %v1642 = vpop.f32.mrf.mxu0
      %v1643 = vadd.f32 %v1604, %v1642
      %1644 = vmatmul.bf16.gmra.mxu0 %v1623
      %v1645 = vpop.f32.mrf.mxu0
      %v1646 = vadd.f32 %v1604, %v1645
      %v1647 = vpop.f32.mrf.mxu0
      %v1648 = vadd.f32 %v1604, %v1647
      %1649 = vmatmul.bf16.gmra.mxu0 %v1626
      %v1650 = vpop.f32.mrf.mxu0
      %v1651 = vadd.f32 %v1604, %v1650
      %v1652 = vpop.f32.mrf.mxu0
      %v1653 = vadd.f32 %v1604, %v1652
      %1654 = vmatmul.bf16.gmra.mxu0 %v1629
      %v1655 = vpop.f32.mrf.mxu0
      %v1656 = vadd.f32 %v1604, %v1655
      %v1657 = vpop.f32.mrf.mxu0
      %v1658 = vadd.f32 %v1604, %v1657
      %1659 = vdwg.mxu0
      %1660 = vmatpush.bf16.msra.mxu0 0
      %1661 = vmatpush.bf16.msra.mxu0 0
      %1662 = vmatpush.bf16.msra.mxu0 0
      %1663 = vmatpush.bf16.msra.mxu0 0
      %1664 = vmatpush.bf16.msra.mxu0 0
      %1665 = vmatpush.bf16.msra.mxu0 0
      %1666 = vmatpush.bf16.msra.mxu0 0
      %1667 = vmatpush.bf16.msra.mxu0 %v1615
      %1668 = vmatmul.bf16.gmra.mxu0 %v1620
      %v1669 = vpop.f32.mrf.mxu0
      %v1670 = vadd.f32 %v1605, %v1669
      %v1671 = vpop.f32.mrf.mxu0
      %v1672 = vadd.f32 %v1605, %v1671
      %1673 = vmatmul.bf16.gmra.mxu0 %v1623
      %v1674 = vpop.f32.mrf.mxu0
      %v1675 = vadd.f32 %v1605, %v1674
      %v1676 = vpop.f32.mrf.mxu0
      %v1677 = vadd.f32 %v1605, %v1676
      %1678 = vmatmul.bf16.gmra.mxu0 %v1626
      %v1679 = vpop.f32.mrf.mxu0
      %v1680 = vadd.f32 %v1605, %v1679
      %v1681 = vpop.f32.mrf.mxu0
      %v1682 = vadd.f32 %v1605, %v1681
      %1683 = vmatmul.bf16.gmra.mxu0 %v1629
      %v1684 = vpop.f32.mrf.mxu0
      %v1685 = vadd.f32 %v1605, %v1684
      %v1686 = vpop.f32.mrf.mxu0
      %v1687 = vadd.f32 %v1605, %v1686
      %1688 = vdwg.mxu0
      %vm1689 = vcmp.ge.f32.partialorder %v1641, 0.0
      %vm1690 = vcmp.ge.f32.partialorder %v1670, 0.0
      %vm1691 = vcmp.ge.f32.partialorder %v1643, 0.0
      %vm1692 = vcmp.ge.f32.partialorder %v1672, 0.0
      %vm1693 = vcmp.ge.f32.partialorder %v1646, 0.0
      %vm1694 = vcmp.ge.f32.partialorder %v1675, 0.0
      %vm1695 = vcmp.ge.f32.partialorder %v1648, 0.0
      %vm1696 = vcmp.ge.f32.partialorder %v1677, 0.0
      %vm1697 = vcmp.ge.f32.partialorder %v1651, 0.0
      %vm1698 = vcmp.ge.f32.partialorder %v1680, 0.0
      %vm1699 = vcmp.ge.f32.partialorder %v1653, 0.0
      %vm1700 = vcmp.ge.f32.partialorder %v1682, 0.0
      %vm1701 = vcmp.ge.f32.partialorder %v1656, 0.0
      %vm1702 = vcmp.ge.f32.partialorder %v1685, 0.0
      %vm1703 = vcmp.ge.f32.partialorder %v1658, 0.0
      %vm1704 = vcmp.ge.f32.partialorder %v1687, 0.0
      %v1705 = vmul.f32 %v1641, 0.2
      %v1706 = vmul.f32 %v1670, 0.2
      %v1707 = vmul.f32 %v1643, 0.2
      %v1708 = vmul.f32 %v1672, 0.2
      %v1709 = vmul.f32 %v1646, 0.2
      %v1710 = vmul.f32 %v1675, 0.2
      %v1711 = vmul.f32 %v1648, 0.2
      %v1712 = vmul.f32 %v1677, 0.2
      %v1713 = vmul.f32 %v1651, 0.2
      %v1714 = vmul.f32 %v1680, 0.2
      %v1715 = vmul.f32 %v1653, 0.2
      %v1716 = vmul.f32 %v1682, 0.2
      %v1717 = vmul.f32 %v1656, 0.2
      %v1718 = vmul.f32 %v1685, 0.2
      %v1719 = vmul.f32 %v1658, 0.2
      %v1720 = vmul.f32 %v1687, 0.2
      %v1721 = vsel %vm1689, %v1641, %v1705
      %v1722 = vsel %vm1690, %v1670, %v1706
      %v1723 = vsel %vm1691, %v1643, %v1707
      %v1724 = vsel %vm1692, %v1672, %v1708
      %v1725 = vsel %vm1693, %v1646, %v1709
      %v1726 = vsel %vm1694, %v1675, %v1710
      %v1727 = vsel %vm1695, %v1648, %v1711
      %v1728 = vsel %vm1696, %v1677, %v1712
      %v1729 = vsel %vm1697, %v1651, %v1713
      %v1730 = vsel %vm1698, %v1680, %v1714
      %v1731 = vsel %vm1699, %v1653, %v1715
      %v1732 = vsel %vm1700, %v1682, %v1716
      %v1733 = vsel %vm1701, %v1656, %v1717
      %v1734 = vsel %vm1702, %v1685, %v1718
      %v1735 = vsel %vm1703, %v1658, %v1719
      %v1736 = vsel %vm1704, %v1687, %v1720
      %v1737 = vpack.c.bf16 %v1723, %v1721
      %v1738 = vpack.c.bf16 %v1724, %v1722
      %v1739 = vpack.c.bf16 %v1727, %v1725
      %v1740 = vpack.c.bf16 %v1728, %v1726
      %v1741 = vpack.c.bf16 %v1731, %v1729
      %v1742 = vpack.c.bf16 %v1732, %v1730
      %v1743 = vpack.c.bf16 %v1735, %v1733
      %v1744 = vpack.c.bf16 %v1736, %v1734
      %v1745 = vld [vmem:[%s9] sm:$0xf]
      %v1746 = vld [vmem:[%s9 + $0x4] sm:$0xf]
      %v1747 = vld [vmem:[%s9 + $0x8] sm:$0xf]
      %v1748 = vld [vmem:[%s9 + $0xc] sm:$0xf]
      %v1749 = vld [vmem:[%s9 + $0x10] sm:$0xf]
      %v1750 = vld [vmem:[%s9 + $0x14] sm:$0xf]
      %v1751 = vld [vmem:[%s9 + $0x18] sm:$0xf]
      %v1752 = vld [vmem:[%s9 + $0x1c] sm:$0xf]
      %v1753 = vld [vmem:[%s9 + $0x20] sm:$0xf]
      %v1754 = vld [vmem:[%s9 + $0x24] sm:$0xf]
      %v1755 = vld [vmem:[%s9 + $0x28] sm:$0xf]
      %v1756 = vld [vmem:[%s9 + $0x2c] sm:$0xf]
      %v1757 = vld [vmem:[%s9 + $0x30] sm:$0xf]
      %v1758 = vld [vmem:[%s9 + $0x34] sm:$0xf]
      %v1759 = vld [vmem:[%s9 + $0x38] sm:$0xf]
      %v1760 = vld [vmem:[%s9 + $0x3c] sm:$0xf]
      %v1761 = vld [vmem:[%s9 + $0x40] sm:$0xf]
      %v1762 = vld [vmem:[%s9 + $0x44] sm:$0xf]
      %v1763 = vld [vmem:[%s9 + $0x48] sm:$0xf]
      %v1764 = vld [vmem:[%s9 + $0x4c] sm:$0xf]
      %v1765 = vld [vmem:[%s9 + $0x50] sm:$0xf]
      %v1766 = vld [vmem:[%s9 + $0x54] sm:$0xf]
      %v1767 = vld [vmem:[%s9 + $0x58] sm:$0xf]
      %v1768 = vld [vmem:[%s9 + $0x5c] sm:$0xf]
      %v1769 = vld [vmem:[%s9 + $0x60] sm:$0xf]
      %v1770 = vld [vmem:[%s9 + $0x64] sm:$0xf]
      %v1771 = vld [vmem:[%s9 + $0x68] sm:$0xf]
      %v1772 = vld [vmem:[%s9 + $0x6c] sm:$0xf]
      %v1773 = vld [vmem:[%s9 + $0x70] sm:$0xf]
      %v1774 = vld [vmem:[%s9 + $0x74] sm:$0xf]
      %v1775 = vld [vmem:[%s9 + $0x78] sm:$0xf]
      %v1776 = vld [vmem:[%s9 + $0x7c] sm:$0xf]
      %v1777 = vld [vmem:[%s10] sm:$0x1]
      %v1779 = vperm.slane %v1777, 0
      %v1813 = vunpack.c.l.b16 %v1745
      %v1814 = vunpack.c.l.b16 %v1746
      %v1815 = vunpack.c.l.b16 %v1747
      %v1816 = vunpack.c.l.b16 %v1748
      %v1817 = vunpack.c.l.b16 %v1749
      %v1818 = vunpack.c.l.b16 %v1750
      %v1819 = vunpack.c.l.b16 %v1751
      %v1820 = vunpack.c.l.b16 %v1752
      %v1821 = vunpack.c.l.b16 %v1753
      %v1822 = vunpack.c.l.b16 %v1754
      %v1823 = vunpack.c.l.b16 %v1755
      %v1824 = vunpack.c.l.b16 %v1756
      %v1825 = vunpack.c.l.b16 %v1757
      %v1826 = vunpack.c.l.b16 %v1758
      %v1827 = vunpack.c.l.b16 %v1759
      %v1828 = vunpack.c.l.b16 %v1760
      %v1829 = vunpack.c.l.b16 %v1761
      %v1830 = vunpack.c.l.b16 %v1762
      %v1831 = vunpack.c.l.b16 %v1763
      %v1832 = vunpack.c.l.b16 %v1764
      %v1833 = vunpack.c.l.b16 %v1765
      %v1834 = vunpack.c.l.b16 %v1766
      %v1835 = vunpack.c.l.b16 %v1767
      %v1836 = vunpack.c.l.b16 %v1768
      %v1837 = vunpack.c.l.b16 %v1769
      %v1838 = vunpack.c.l.b16 %v1770
      %v1839 = vunpack.c.l.b16 %v1771
      %v1840 = vunpack.c.l.b16 %v1772
      %v1841 = vunpack.c.l.b16 %v1773
      %v1842 = vunpack.c.l.b16 %v1774
      %v1843 = vunpack.c.l.b16 %v1775
      %v1844 = vunpack.c.l.b16 %v1776
      %v1845 = vpack.c.b16 %v1814, %v1813
      %v1846 = vpack.c.b16 %v1816, %v1815
      %v1847 = vpack.c.b16 %v1818, %v1817
      %v1848 = vpack.c.b16 %v1820, %v1819
      %v1849 = vpack.c.b16 %v1822, %v1821
      %v1850 = vpack.c.b16 %v1824, %v1823
      %v1851 = vpack.c.b16 %v1826, %v1825
      %v1852 = vpack.c.b16 %v1828, %v1827
      %v1853 = vpack.c.b16 %v1830, %v1829
      %v1854 = vpack.c.b16 %v1832, %v1831
      %v1855 = vpack.c.b16 %v1834, %v1833
      %v1856 = vpack.c.b16 %v1836, %v1835
      %v1857 = vpack.c.b16 %v1838, %v1837
      %v1858 = vpack.c.b16 %v1840, %v1839
      %v1859 = vpack.c.b16 %v1842, %v1841
      %v1860 = vpack.c.b16 %v1844, %v1843
      %1877 = vmatpush.bf16.msra.mxu0 %v1852
      %1878 = vmatpush.bf16.msra.mxu0 %v1851
      %1879 = vmatpush.bf16.msra.mxu0 %v1850
      %1880 = vmatpush.bf16.msra.mxu0 %v1849
      %1881 = vmatpush.bf16.msra.mxu0 %v1848
      %1882 = vmatpush.bf16.msra.mxu0 %v1847
      %1883 = vmatpush.bf16.msra.mxu0 %v1846
      %1884 = vmatpush.bf16.msra.mxu0 %v1845
      %1885 = vmatmul.bf16.gmra.mxu0 %v1737
      %v1886 = vpop.f32.mrf.mxu0
      %v1887 = vadd.f32 %v1779, %v1886
      %v1888 = vpop.f32.mrf.mxu0
      %v1889 = vadd.f32 %v1779, %v1888
      %1890 = vmatmul.bf16.gmra.mxu0 %v1739
      %v1891 = vpop.f32.mrf.mxu0
      %v1892 = vadd.f32 %v1779, %v1891
      %v1893 = vpop.f32.mrf.mxu0
      %v1894 = vadd.f32 %v1779, %v1893
      %1895 = vmatmul.bf16.gmra.mxu0 %v1741
      %v1896 = vpop.f32.mrf.mxu0
      %v1897 = vadd.f32 %v1779, %v1896
      %v1898 = vpop.f32.mrf.mxu0
      %v1899 = vadd.f32 %v1779, %v1898
      %1900 = vmatmul.bf16.gmra.mxu0 %v1743
      %v1901 = vpop.f32.mrf.mxu0
      %v1902 = vadd.f32 %v1779, %v1901
      %v1903 = vpop.f32.mrf.mxu0
      %v1904 = vadd.f32 %v1779, %v1903
      %1905 = vdwg.mxu0
      %1906 = vmatpush.bf16.msra.mxu0 %v1860
      %1907 = vmatpush.bf16.msra.mxu0 %v1859
      %1908 = vmatpush.bf16.msra.mxu0 %v1858
      %1909 = vmatpush.bf16.msra.mxu0 %v1857
      %1910 = vmatpush.bf16.msra.mxu0 %v1856
      %1911 = vmatpush.bf16.msra.mxu0 %v1855
      %1912 = vmatpush.bf16.msra.mxu0 %v1854
      %1913 = vmatpush.bf16.msra.mxu0 %v1853
      %1914 = vmatmul.bf16.gmra.mxu0 %v1738
      %v1915 = vpop.f32.mrf.mxu0
      %v1916 = vadd.f32 %v1887, %v1915
      %v1917 = vpop.f32.mrf.mxu0
      %v1918 = vadd.f32 %v1889, %v1917
      %1919 = vmatmul.bf16.gmra.mxu0 %v1740
      %v1920 = vpop.f32.mrf.mxu0
      %v1921 = vadd.f32 %v1892, %v1920
      %v1922 = vpop.f32.mrf.mxu0
      %v1923 = vadd.f32 %v1894, %v1922
      %1924 = vmatmul.bf16.gmra.mxu0 %v1742
      %v1925 = vpop.f32.mrf.mxu0
      %v1926 = vadd.f32 %v1897, %v1925
      %v1927 = vpop.f32.mrf.mxu0
      %v1928 = vadd.f32 %v1899, %v1927
      %1929 = vmatmul.bf16.gmra.mxu0 %v1744
      %v1930 = vpop.f32.mrf.mxu0
      %v1931 = vadd.f32 %v1902, %v1930
      %v1932 = vpop.f32.mrf.mxu0
      %v1933 = vadd.f32 %v1904, %v1932
      %1934 = vdwg.mxu0
      %vm1935 = vcmp.ge.f32.partialorder %v1916, 0.0
      %vm1936 = vcmp.ge.f32.partialorder %v1918, 0.0
      %vm1937 = vcmp.ge.f32.partialorder %v1921, 0.0
      %vm1938 = vcmp.ge.f32.partialorder %v1923, 0.0
      %vm1939 = vcmp.ge.f32.partialorder %v1926, 0.0
      %vm1940 = vcmp.ge.f32.partialorder %v1928, 0.0
      %vm1941 = vcmp.ge.f32.partialorder %v1931, 0.0
      %vm1942 = vcmp.ge.f32.partialorder %v1933, 0.0
      %v1943 = vmul.f32 %v1916, 0.2
      %v1944 = vmul.f32 %v1918, 0.2
      %v1945 = vmul.f32 %v1921, 0.2
      %v1946 = vmul.f32 %v1923, 0.2
      %v1947 = vmul.f32 %v1926, 0.2
      %v1948 = vmul.f32 %v1928, 0.2
      %v1949 = vmul.f32 %v1931, 0.2
      %v1950 = vmul.f32 %v1933, 0.2
      %v1951 = vsel %vm1935, %v1916, %v1943
      %v1952 = vsel %vm1936, %v1918, %v1944
      %v1953 = vsel %vm1937, %v1921, %v1945
      %v1954 = vsel %vm1938, %v1923, %v1946
      %v1955 = vsel %vm1939, %v1926, %v1947
      %v1956 = vsel %vm1940, %v1928, %v1948
      %v1957 = vsel %vm1941, %v1931, %v1949
      %v1958 = vsel %vm1942, %v1933, %v1950
      %1959 = vst.msk [vmem:[%s410] sm:$0xff] %vm481, %v1951
      %1960 = vst.msk [vmem:[%s410 + $0x8] sm:$0xff] %vm481, %v1952
      %1961 = vst.msk [vmem:[%s410 + $0x10] sm:$0xff] %vm481, %v1953
      %1962 = vst.msk [vmem:[%s410 + $0x18] sm:$0xff] %vm481, %v1954
      %1963 = vst.msk [vmem:[%s410 + $0x20] sm:$0xff] %vm481, %v1955
      %1964 = vst.msk [vmem:[%s410 + $0x28] sm:$0xff] %vm481, %v1956
      %1965 = vst.msk [vmem:[%s410 + $0x30] sm:$0xff] %vm481, %v1957
      %1966 = vst.msk [vmem:[%s410 + $0x38] sm:$0xff] %vm481, %v1958
      %1975 = vrot.lane.b32.xlu0 %v929, 32
      %v1976 = vpop.permute.xlu0 %1975
      %1977 = vrot.lane.b32.xlu0 %v931, 32
      %v1978 = vpop.permute.xlu0 %1977
      %1979 = vrot.lane.b32.xlu0 %v934, 32
      %v1980 = vpop.permute.xlu0 %1979
      %1981 = vrot.lane.b32.xlu0 %v936, 32
      %v1982 = vpop.permute.xlu0 %1981
      %1983 = vrot.lane.b32.xlu0 %v939, 32
      %v1984 = vpop.permute.xlu0 %1983
      %1985 = vrot.lane.b32.xlu0 %v941, 32
      %v1986 = vpop.permute.xlu0 %1985
      %1987 = vrot.lane.b32.xlu0 %v944, 32
      %v1988 = vpop.permute.xlu0 %1987
      %1989 = vrot.lane.b32.xlu0 %v946, 32
      %v1990 = vpop.permute.xlu0 %1989
      %vm1999 = vcmask 326912
      %2000 = vst.msk [vmem:[%s410] sm:$0xff] %vm1999, %v1976
      %2001 = vst.msk [vmem:[%s410 + $0x8] sm:$0xff] %vm1999, %v1978
      %2002 = vst.msk [vmem:[%s410 + $0x10] sm:$0xff] %vm1999, %v1980
      %2003 = vst.msk [vmem:[%s410 + $0x18] sm:$0xff] %vm1999, %v1982
      %2004 = vst.msk [vmem:[%s410 + $0x20] sm:$0xff] %vm1999, %v1984
      %2005 = vst.msk [vmem:[%s410 + $0x28] sm:$0xff] %vm1999, %v1986
      %2006 = vst.msk [vmem:[%s410 + $0x30] sm:$0xff] %vm1999, %v1988
      %2007 = vst.msk [vmem:[%s410 + $0x38] sm:$0xff] %vm1999, %v1990
      %2016 = vrot.lane.b32.xlu0 %v1060, 32
      %v2017 = vpop.permute.xlu0 %2016
      %2018 = vrot.lane.b32.xlu0 %v1061, 32
      %v2019 = vpop.permute.xlu0 %2018
      %2020 = vrot.lane.b32.xlu0 %v1062, 32
      %v2021 = vpop.permute.xlu0 %2020
      %2022 = vrot.lane.b32.xlu0 %v1063, 32
      %v2023 = vpop.permute.xlu0 %2022
      %2024 = vrot.lane.b32.xlu0 %v1064, 32
      %v2025 = vpop.permute.xlu0 %2024
      %2026 = vrot.lane.b32.xlu0 %v1065, 32
      %v2027 = vpop.permute.xlu0 %2026
      %2028 = vrot.lane.b32.xlu0 %v1066, 32
      %v2029 = vpop.permute.xlu0 %2028
      %2030 = vrot.lane.b32.xlu0 %v1067, 32
      %v2031 = vpop.permute.xlu0 %2030
      %vm2040 = vcmask 392512
      %2041 = vst.msk [vmem:[%s410] sm:$0xff] %vm2040, %v2017
      %2042 = vst.msk [vmem:[%s410 + $0x8] sm:$0xff] %vm2040, %v2019
      %2043 = vst.msk [vmem:[%s410 + $0x10] sm:$0xff] %vm2040, %v2021
      %2044 = vst.msk [vmem:[%s410 + $0x18] sm:$0xff] %vm2040, %v2023
      %2045 = vst.msk [vmem:[%s410 + $0x20] sm:$0xff] %vm2040, %v2025
      %2046 = vst.msk [vmem:[%s410 + $0x28] sm:$0xff] %vm2040, %v2027
      %2047 = vst.msk [vmem:[%s410 + $0x30] sm:$0xff] %vm2040, %v2029
      %2048 = vst.msk [vmem:[%s410 + $0x38] sm:$0xff] %vm2040, %v2031
      %s2049 = smul.u32 8, %s22
      %p2050 = scmp.lt.s32.totalorder %s2049, 15
      %s2051 = scalar_select %p2050, %s2049, 15
      %s2052 = smul.addr %s2051, 8
      %s2053 = scalar_lea.vmem %s11, %s2052
      // Predicated region
      $region65: #{tpu_custom_call.1} parent=63 // pred_check
        %p2054 = pneg %p281
      $region66: #{tpu_custom_call.1} parent=63 // pred_check_branch
        %2056 = sbr.rel (%p2054) target = $region68
      $region67: #{tpu_custom_call.1} parent=63 // pred_region
        %s2057 = smul.u32 8, %s22
      $region68: #{tpu_custom_call.1} parent=63 // pred_fallthru
        _
    $region64: #{tpu_custom_call.1} parent=5 // pred_fallthru
      _
    %p2058 = scmp.le.s32.totalorder 2, %s17
    // Predicated region
    $region69: #{tpu_custom_call.1} parent=5 // pred_check
      %p2059 = pneg %p2058
    $region70: #{tpu_custom_call.1} parent=5 // pred_check_branch
      %2061 = sbr.rel (%p2059) target = $region72
    $region71: #{tpu_custom_call.1} parent=5 // pred_region
      %s2062 = ssub.s32 %s17, 2
      // Predicated region
      $region73: #{tpu_custom_call.1} parent=71 // pred_check
        %p2063 = pneg %p287
      $region74: #{tpu_custom_call.1} parent=71 // pred_check_branch
        %2065 = sbr.rel (%p2063) target = $region76
      $region75: #{tpu_custom_call.1} parent=71 // pred_region
        %s2066 = smul.u32 8, %s23
        %p2067 = scmp.lt.s32.totalorder %s2066, 15
        %s2068 = scalar_select %p2067, %s2066, 15
        %s2069 = smul.addr %s2068, 8
        %s2070 = scalar_lea.vmem %s11, %s2069
      $region76: #{tpu_custom_call.1} parent=71 // pred_fallthru
        _
    $region72: #{tpu_custom_call.1} parent=5 // pred_fallthru
      _
  $region6: #{tpu_custom_call.1} parent=0 // loop_footer
    %s21 = sadd.s32 1, %s17
  $region7: #{tpu_custom_call.1} parent=0 // loop_footer_branch
    %16 = sbr.rel target = $region3
  $region8: #{tpu_custom_call.1} parent=0 // loop_exit
    _

</llo_original>
